<compile_context>
chip_gen: v7x
topology: tpu7x:2x2x1
jax: 0.10.0
libtpu: 0.0.40
codegen_flags: <defaults>
</compile_context>

<pallas_src>
import functools

import jax
import jax.numpy as jnp
from jax.experimental import pallas as pl
from jax.experimental.pallas import tpu as pltpu

_LN_EPS = 1e-5                 # torch.nn.LayerNorm default
_RELU_EPS = 1e-6               # EpsilonReLU default
_INV_SQRT2 = 0.7071067811865476


def _erf(z):
    # Abramowitz & Stegun 7.1.26 rational approximation, |err| < 1.5e-7.
    # Matches torch nn.GELU()'s exact-erf form to ~1e-6 (vs ~1e-3 for tanh).
    p = 0.3275911
    a1, a2, a3, a4, a5 = (0.254829592, -0.284496736, 1.421413741,
                          -1.453152027, 1.061405429)
    az = jnp.abs(z)
    t = 1.0 / (1.0 + p * az)
    poly = t * (a1 + t * (a2 + t * (a3 + t * (a4 + t * a5))))
    y = 1.0 - poly * jnp.exp(-az * az)
    return jnp.where(z < 0.0, -y, y)


def _gelu_erf(x):
    return 0.5 * x * (1.0 + _erf(x * _INV_SQRT2))


def _layernorm(v, g, b, mask, inv_n, eps):
    """LayerNorm over the last axis; statistics over the true (unpadded) lanes."""
    vm = v if mask is None else jnp.where(mask, v, 0.0)
    mu = jnp.sum(vm, axis=-1, keepdims=True) * inv_n
    xc = v - mu
    xcm = xc if mask is None else jnp.where(mask, xc, 0.0)
    var = jnp.sum(xcm * xcm, axis=-1, keepdims=True) * inv_n
    return xc * jax.lax.rsqrt(var + eps) * g + b


def _resblock_kernel(x_ref, g1_ref, b1_ref, fw_ref, aw_ref, ab_ref,
                     g2_ref, b2_ref, w1_ref, bb1_ref, w2_ref, bb2_ref,
                     o_ref, *, d_true, ln_eps, relu_eps):
    bb, seq, dp = x_ref.shape
    inv_d = 1.0 / d_true
    if d_true == dp:
        mask2 = mask3 = None
    else:
        lane = jax.lax.broadcasted_iota(jnp.int32, (1, dp), 1) < d_true
        mask2 = lane            # (1, Dp)    for (M, Dp) tensors
        mask3 = lane[None]      # (1, 1, Dp) for (BB, L, Dp) tensors

    x = x_ref[...]                                          # (BB, L, Dp)

    # ---- LayerNorm1 + EpsilonReLU --------------------------------------
    h = _layernorm(x, g1_ref[...], b1_ref[...], mask3, inv_d, ln_eps)
    h = jnp.maximum(h, 0.0) + relu_eps

    # ---- GlobalSPSDFilter -----------------------------------------------
    # TODO(synk): SPSD.SPSD1D (fractional spectral transform) is an external
    # dependency with no definition in the spec; stand-in = identity on the
    # sequence with maxHolder = per-channel max over the sequence (PoolType.MAX).
    max_h = jnp.max(h, axis=1, keepdims=True)               # (BB, 1, Dp) == maxHolder
    h = h * fw_ref[...]                                     # learned filter weight (L, Dp)

    # ---- alphaEmbed(maxHolder).transpose(1, 2), add ----------------------
    # relu(maxHolder[b, d] * W[l] + bias[l]) broadcast over channels.
    alpha = jnp.maximum(aw_ref[...] * max_h + ab_ref[...], 0.0)
    x0 = (h + alpha).reshape(bb * seq, dp)                  # flatten batch into GEMM rows

    # ---- LayerNorm2 + Mlp (fc1 -> GELU -> fc2) + residual ----------------
    hn = _layernorm(x0, g2_ref[...], b2_ref[...], mask2, inv_d, ln_eps)
    a = jnp.dot(hn, w1_ref[...], preferred_element_type=jnp.float32) + bb1_ref[...]
    a = _gelu_erf(a)
    y = jnp.dot(a, w2_ref[...], preferred_element_type=jnp.float32) + bb2_ref[...]

    out = x.reshape(bb * seq, dp) + y                       # drop_path/dropout = identity
    o_ref[...] = out.reshape(bb, seq, dp).astype(o_ref.dtype)


def _round_up(n, m):
    return ((n + m - 1) // m) * m


def _pad_axis(a, axis, target):
    pad = target - a.shape[axis]
    if pad == 0:
        return a
    widths = [(0, 0)] * a.ndim
    widths[axis] = (0, pad)
    return jnp.pad(a, widths)


def resblock_forward(x, params, *, batch_block=None,
                     ln_eps=_LN_EPS, relu_eps=_RELU_EPS):
    """Fused ResBlock forward.  x: (B, L, D) float32."""
    B, L, D = x.shape
    H = params["w1"].shape[1]

    # Lane-dense layout: pad channel/hidden dims to a multiple of 128 lanes so
    # all stores are unmasked.  Zero-padded gamma/beta/weights keep padded
    # lanes inert; LN stats are masked to the true D inside the kernel.
    Dp = _round_up(D, 128)
    Hp = _round_up(H, 128)

    if batch_block is None:
        # >=2 "parallel" grid steps when possible so v7x's two TensorCores both
        # get work; B == 1 collapses to a single step (extra steps are pure
        # per-step overhead on single-TC v5e/v6e).
        batch_block = B if B == 1 else next(
            d for d in range(B // 2, 0, -1) if B % d == 0)
    assert B % batch_block == 0
    grid = (B // batch_block,)

    xp = _pad_axis(x, 2, Dp)
    g1 = _pad_axis(params["g1"], 1, Dp)
    b1 = _pad_axis(params["b1"], 1, Dp)
    g2 = _pad_axis(params["g2"], 1, Dp)
    b2 = _pad_axis(params["b2"], 1, Dp)
    fw = _pad_axis(params["fw"], 1, Dp)
    w1 = _pad_axis(_pad_axis(params["w1"], 0, Dp), 1, Hp)
    bb1 = _pad_axis(params["bb1"], 1, Hp)
    w2 = _pad_axis(_pad_axis(params["w2"], 0, Hp), 1, Dp)
    bb2 = _pad_axis(params["bb2"], 1, Dp)
    aw, ab = params["aw"], params["ab"]

    per_step = pl.BlockSpec((batch_block, L, Dp), lambda i: (i, 0, 0))

    def whole(shape):
        return pl.BlockSpec(shape, lambda i, _s=len(shape): (0,) * _s)

    flops = 4 * B * L * Dp * Hp + 12 * B * L * Dp           # two GEMMs + elementwise
    transcendentals = B * L * (Hp + 2)                       # erf exp + 2 LN rsqrt per row
    bytes_accessed = 4 * (2 * B * L * Dp                     # x in + out
                          + 2 * Dp * Hp                      # fc1/fc2 weights
                          + L * Dp + 2 * L                   # filter weight + alphaEmbed
                          + 5 * Dp + Hp)                     # LN params + biases
    cost = pl.CostEstimate(flops=flops, transcendentals=transcendentals,
                           bytes_accessed=bytes_accessed)

    out = pl.pallas_call(
        functools.partial(_resblock_kernel, d_true=D, ln_eps=ln_eps,
                          relu_eps=relu_eps),
        out_shape=jax.ShapeDtypeStruct((B, L, Dp), x.dtype),
        grid=grid,
        in_specs=[
            per_step,                              # x
            whole((1, Dp)), whole((1, Dp)),        # gamma1, beta1
            whole((L, Dp)),                        # GlobalSPSDFilter.weight
            whole((L, 1)), whole((L, 1)),          # alphaEmbed Linear(1,len) weight / bias
            whole((1, Dp)), whole((1, Dp)),        # gamma2, beta2
            whole((Dp, Hp)), whole((1, Hp)),       # fc1 weight, bias
            whole((Hp, Dp)), whole((1, Dp)),       # fc2 weight, bias
        ],
        out_specs=per_step,
        input_output_aliases={0: 0},               # reuse residual's HBM buffer
        compiler_params=pltpu.CompilerParams(
            dimension_semantics=("parallel",)),
        cost_estimate=cost,
    )(xp, g1, b1, fw, aw, ab, g2, b2, w1, bb1, w2, bb2)

    return out[..., :D] if Dp != D else out


def resblock_reference(x, p, *, ln_eps=_LN_EPS, relu_eps=_RELU_EPS):
    """Plain-JAX reference (same SPSD stand-in; exact-erf GELU like nn.GELU)."""
    def ln(v, g, b):
        mu = v.mean(-1, keepdims=True)
        var = ((v - mu) ** 2).mean(-1, keepdims=True)
        return (v - mu) * jax.lax.rsqrt(var + ln_eps) * g + b

    h = jnp.maximum(ln(x, p["g1"], p["b1"]), 0.0) + relu_eps
    max_h = h.max(axis=1, keepdims=True)                       # (B, 1, D) == maxHolder
    h = h * p["fw"]
    alpha = jnp.maximum(p["aw"][None] * max_h + p["ab"][None], 0.0)
    x0 = h + alpha
    hn = ln(x0, p["g2"], p["b2"])
    a = hn @ p["w1"] + p["bb1"]
    a = jax.nn.gelu(a, approximate=False)                      # exact-erf GELU
    y = a @ p["w2"] + p["bb2"]
    return x + y


if __name__ == "__main__":
    key = jax.random.PRNGKey(0)
    B, L, D = 2, 64, 32            # batch, len (ResBlock default 64), dim
    H = int(D * 4.0)               # mlp hidden (mlp_ratio=4)
    f32 = jnp.float32
    ks = jax.random.split(key, 9)

    x = jax.random.normal(ks[0], (B, L, D), dtype=f32)
    params = dict(
        g1=jnp.ones((1, D), f32), b1=jnp.zeros((1, D), f32),            # norm1
        g2=jnp.ones((1, D), f32), b2=jnp.zeros((1, D), f32),            # norm2
        fw=0.02 * jax.random.normal(ks[1], (L, D), dtype=f32),          # filter.weight
        aw=0.1 * jax.random.normal(ks[2], (L, 1), dtype=f32),           # alphaEmbed Linear(1,len).weight
        ab=0.1 * jax.random.normal(ks[3], (L, 1), dtype=f32),           # alphaEmbed bias
        w1=0.1 * jax.random.normal(ks[4], (D, H), dtype=f32),           # Mlp.fc1 weight
        bb1=0.1 * jax.random.normal(ks[5], (1, H), dtype=f32),          # Mlp.fc1 bias
        w2=0.1 * jax.random.normal(ks[6], (H, D), dtype=f32),           # Mlp.fc2 weight
        bb2=0.1 * jax.random.normal(ks[7], (1, D), dtype=f32),          # Mlp.fc2 bias
    )

    y = jax.block_until_ready(resblock_forward(x, params))
    ref = resblock_reference(x, params)

    assert y.shape == x.shape and y.dtype == x.dtype
    max_diff = float(jnp.max(jnp.abs(y - ref)))
    assert jnp.allclose(y, ref, atol=1e-4, rtol=1e-4), \
        f"mismatch vs reference (max|diff|={max_diff})"
    print("KERNEL_OK")
</pallas_src>

<mosaic_0001>
module attributes {stable_mosaic.version = 11 : i64} {
  func.func @_resblock_kernel(%arg0: i32, %arg1: memref<1x64x128xf32, #tpu.memory_space<vmem>>, %arg2: memref<1x128xf32, #tpu.memory_space<vmem>>, %arg3: memref<1x128xf32, #tpu.memory_space<vmem>>, %arg4: memref<64x128xf32, #tpu.memory_space<vmem>>, %arg5: memref<64x1xf32, #tpu.memory_space<vmem>>, %arg6: memref<64x1xf32, #tpu.memory_space<vmem>>, %arg7: memref<1x128xf32, #tpu.memory_space<vmem>>, %arg8: memref<1x128xf32, #tpu.memory_space<vmem>>, %arg9: memref<128x128xf32, #tpu.memory_space<vmem>>, %arg10: memref<1x128xf32, #tpu.memory_space<vmem>>, %arg11: memref<128x128xf32, #tpu.memory_space<vmem>>, %arg12: memref<1x128xf32, #tpu.memory_space<vmem>>, %arg13: memref<1x64x128xf32, #tpu.memory_space<vmem>>) attributes {dimension_semantics = [#tpu.dimension_semantics<parallel>], iteration_bounds = array<i64: 2>, scalar_prefetch = 0 : i64, scratch_operands = 0 : i64, tpu.core_type = #tpu.core_type<tc>, window_params = [{transform_indices = @transform_0, window_bounds = array<i64: 1, 64, 128>}, {pipeline_mode = #tpu.pipeline_mode<synchronous>, transform_indices = @transform_1, window_bounds = array<i64: 1, 128>}, {pipeline_mode = #tpu.pipeline_mode<synchronous>, transform_indices = @transform_2, window_bounds = array<i64: 1, 128>}, {pipeline_mode = #tpu.pipeline_mode<synchronous>, transform_indices = @transform_3, window_bounds = array<i64: 64, 128>}, {pipeline_mode = #tpu.pipeline_mode<synchronous>, transform_indices = @transform_4, window_bounds = array<i64: 64, 1>}, {pipeline_mode = #tpu.pipeline_mode<synchronous>, transform_indices = @transform_5, window_bounds = array<i64: 64, 1>}, {pipeline_mode = #tpu.pipeline_mode<synchronous>, transform_indices = @transform_6, window_bounds = array<i64: 1, 128>}, {pipeline_mode = #tpu.pipeline_mode<synchronous>, transform_indices = @transform_7, window_bounds = array<i64: 1, 128>}, {pipeline_mode = #tpu.pipeline_mode<synchronous>, transform_indices = @transform_8, window_bounds = array<i64: 128, 128>}, {pipeline_mode = #tpu.pipeline_mode<synchronous>, transform_indices = @transform_9, window_bounds = array<i64: 1, 128>}, {pipeline_mode = #tpu.pipeline_mode<synchronous>, transform_indices = @transform_10, window_bounds = array<i64: 128, 128>}, {pipeline_mode = #tpu.pipeline_mode<synchronous>, transform_indices = @transform_11, window_bounds = array<i64: 1, 128>}, {transform_indices = @transform_12, window_bounds = array<i64: 1, 64, 128>}]} {
    %0 = tpu.iota {dimensions = array<i32: 1>} : vector<1x128xi32>
    %c32_i32 = arith.constant 32 : i32
    %1 = vector.broadcast %c32_i32 : i32 to vector<1x128xi32>
    %2 = arith.cmpi slt, %0, %1 : vector<1x128xi32>
    %3 = vector.shape_cast %2 : vector<1x128xi1> to vector<1x1x128xi1>
    %c0 = arith.constant 0 : index
    %c0_0 = arith.constant 0 : index
    %c0_1 = arith.constant 0 : index
    %4 = vector.load %arg1[%c0, %c0_0, %c0_1] : memref<1x64x128xf32, #tpu.memory_space<vmem>>, vector<1x64x128xf32>
    %c0_2 = arith.constant 0 : index
    %c0_3 = arith.constant 0 : index
    %5 = vector.load %arg2[%c0_2, %c0_3] : memref<1x128xf32, #tpu.memory_space<vmem>>, vector<1x128xf32>
    %c0_4 = arith.constant 0 : index
    %c0_5 = arith.constant 0 : index
    %6 = vector.load %arg3[%c0_4, %c0_5] : memref<1x128xf32, #tpu.memory_space<vmem>>, vector<1x128xf32>
    %cst = arith.constant 0.000000e+00 : f32
    %7 = vector.shape_cast %3 : vector<1x1x128xi1> to vector<1x1x128xi1>
    %8 = vector.broadcast %7 : vector<1x1x128xi1> to vector<1x64x128xi1>
    %9 = vector.broadcast %cst : f32 to vector<1x64x128xf32>
    %10 = arith.select %8, %4, %9 : vector<1x64x128xi1>, vector<1x64x128xf32>
    %cst_6 = arith.constant dense<0.000000e+00> : vector<1x64xf32>
    %11 = vector.multi_reduction <add>, %10, %cst_6 [2] : vector<1x64x128xf32> to vector<1x64xf32>
    %12 = vector.shape_cast %11 : vector<1x64xf32> to vector<1x64x1xf32>
    %cst_7 = arith.constant 3.125000e-02 : f32
    %13 = vector.broadcast %cst_7 : f32 to vector<1x64x1xf32>
    %14 = arith.mulf %12, %13 : vector<1x64x1xf32>
    %15 = vector.broadcast %14 : vector<1x64x1xf32> to vector<1x64x128xf32>
    %16 = arith.subf %4, %15 : vector<1x64x128xf32>
    %cst_8 = arith.constant 0.000000e+00 : f32
    %17 = vector.shape_cast %3 : vector<1x1x128xi1> to vector<1x1x128xi1>
    %18 = vector.broadcast %17 : vector<1x1x128xi1> to vector<1x64x128xi1>
    %19 = vector.broadcast %cst_8 : f32 to vector<1x64x128xf32>
    %20 = arith.select %18, %16, %19 : vector<1x64x128xi1>, vector<1x64x128xf32>
    %21 = arith.mulf %20, %20 : vector<1x64x128xf32>
    %cst_9 = arith.constant dense<0.000000e+00> : vector<1x64xf32>
    %22 = vector.multi_reduction <add>, %21, %cst_9 [2] : vector<1x64x128xf32> to vector<1x64xf32>
    %23 = vector.shape_cast %22 : vector<1x64xf32> to vector<1x64x1xf32>
    %cst_10 = arith.constant 3.125000e-02 : f32
    %24 = vector.broadcast %cst_10 : f32 to vector<1x64x1xf32>
    %25 = arith.mulf %23, %24 : vector<1x64x1xf32>
    %cst_11 = arith.constant 9.99999974E-6 : f32
    %26 = vector.broadcast %cst_11 : f32 to vector<1x64x1xf32>
    %27 = arith.addf %25, %26 : vector<1x64x1xf32>
    %28 = math.rsqrt %27 : vector<1x64x1xf32>
    %29 = vector.broadcast %28 : vector<1x64x1xf32> to vector<1x64x128xf32>
    %30 = arith.mulf %16, %29 : vector<1x64x128xf32>
    %31 = vector.shape_cast %5 : vector<1x128xf32> to vector<1x1x128xf32>
    %32 = vector.broadcast %31 : vector<1x1x128xf32> to vector<1x64x128xf32>
    %33 = arith.mulf %30, %32 : vector<1x64x128xf32>
    %34 = vector.shape_cast %6 : vector<1x128xf32> to vector<1x1x128xf32>
    %35 = vector.broadcast %34 : vector<1x1x128xf32> to vector<1x64x128xf32>
    %36 = arith.addf %33, %35 : vector<1x64x128xf32>
    %cst_12 = arith.constant 0.000000e+00 : f32
    %37 = vector.broadcast %cst_12 : f32 to vector<1x64x128xf32>
    %38 = arith.maximumf %36, %37 : vector<1x64x128xf32>
    %cst_13 = arith.constant 9.99999997E-7 : f32
    %39 = vector.broadcast %cst_13 : f32 to vector<1x64x128xf32>
    %40 = arith.addf %38, %39 : vector<1x64x128xf32>
    %cst_14 = arith.constant dense<0xFF800000> : vector<1x128xf32>
    %41 = vector.multi_reduction <maximumf>, %40, %cst_14 [1] : vector<1x64x128xf32> to vector<1x128xf32>
    %42 = vector.shape_cast %41 : vector<1x128xf32> to vector<1x1x128xf32>
    %c0_15 = arith.constant 0 : index
    %c0_16 = arith.constant 0 : index
    %43 = vector.load %arg4[%c0_15, %c0_16] : memref<64x128xf32, #tpu.memory_space<vmem>>, vector<64x128xf32>
    %44 = vector.shape_cast %43 : vector<64x128xf32> to vector<1x64x128xf32>
    %45 = arith.mulf %40, %44 : vector<1x64x128xf32>
    %c0_17 = arith.constant 0 : index
    %c0_18 = arith.constant 0 : index
    %46 = vector.load %arg5[%c0_17, %c0_18] : memref<64x1xf32, #tpu.memory_space<vmem>>, vector<64x1xf32>
    %47 = vector.shape_cast %46 : vector<64x1xf32> to vector<1x64x1xf32>
    %48 = vector.broadcast %47 : vector<1x64x1xf32> to vector<1x64x128xf32>
    %49 = vector.broadcast %42 : vector<1x1x128xf32> to vector<1x64x128xf32>
    %50 = arith.mulf %48, %49 : vector<1x64x128xf32>
    %c0_19 = arith.constant 0 : index
    %c0_20 = arith.constant 0 : index
    %51 = vector.load %arg6[%c0_19, %c0_20] : memref<64x1xf32, #tpu.memory_space<vmem>>, vector<64x1xf32>
    %52 = vector.shape_cast %51 : vector<64x1xf32> to vector<1x64x1xf32>
    %53 = vector.broadcast %52 : vector<1x64x1xf32> to vector<1x64x128xf32>
    %54 = arith.addf %50, %53 : vector<1x64x128xf32>
    %cst_21 = arith.constant 0.000000e+00 : f32
    %55 = vector.broadcast %cst_21 : f32 to vector<1x64x128xf32>
    %56 = arith.maximumf %54, %55 : vector<1x64x128xf32>
    %57 = arith.addf %45, %56 : vector<1x64x128xf32>
    %58 = vector.shape_cast %57 : vector<1x64x128xf32> to vector<64x128xf32>
    %c0_22 = arith.constant 0 : index
    %c0_23 = arith.constant 0 : index
    %59 = vector.load %arg7[%c0_22, %c0_23] : memref<1x128xf32, #tpu.memory_space<vmem>>, vector<1x128xf32>
    %c0_24 = arith.constant 0 : index
    %c0_25 = arith.constant 0 : index
    %60 = vector.load %arg8[%c0_24, %c0_25] : memref<1x128xf32, #tpu.memory_space<vmem>>, vector<1x128xf32>
    %cst_26 = arith.constant 0.000000e+00 : f32
    %61 = vector.shape_cast %2 : vector<1x128xi1> to vector<1x128xi1>
    %62 = vector.broadcast %61 : vector<1x128xi1> to vector<64x128xi1>
    %63 = vector.broadcast %cst_26 : f32 to vector<64x128xf32>
    %64 = arith.select %62, %58, %63 : vector<64x128xi1>, vector<64x128xf32>
    %cst_27 = arith.constant dense<0.000000e+00> : vector<64xf32>
    %65 = vector.multi_reduction <add>, %64, %cst_27 [1] : vector<64x128xf32> to vector<64xf32>
    %66 = vector.shape_cast %65 : vector<64xf32> to vector<64x1xf32>
    %cst_28 = arith.constant 3.125000e-02 : f32
    %67 = vector.broadcast %cst_28 : f32 to vector<64x1xf32>
    %68 = arith.mulf %66, %67 : vector<64x1xf32>
    %69 = vector.broadcast %68 : vector<64x1xf32> to vector<64x128xf32>
    %70 = arith.subf %58, %69 : vector<64x128xf32>
    %cst_29 = arith.constant 0.000000e+00 : f32
    %71 = vector.shape_cast %2 : vector<1x128xi1> to vector<1x128xi1>
    %72 = vector.broadcast %71 : vector<1x128xi1> to vector<64x128xi1>
    %73 = vector.broadcast %cst_29 : f32 to vector<64x128xf32>
    %74 = arith.select %72, %70, %73 : vector<64x128xi1>, vector<64x128xf32>
    %75 = arith.mulf %74, %74 : vector<64x128xf32>
    %cst_30 = arith.constant dense<0.000000e+00> : vector<64xf32>
    %76 = vector.multi_reduction <add>, %75, %cst_30 [1] : vector<64x128xf32> to vector<64xf32>
    %77 = vector.shape_cast %76 : vector<64xf32> to vector<64x1xf32>
    %cst_31 = arith.constant 3.125000e-02 : f32
    %78 = vector.broadcast %cst_31 : f32 to vector<64x1xf32>
    %79 = arith.mulf %77, %78 : vector<64x1xf32>
    %cst_32 = arith.constant 9.99999974E-6 : f32
    %80 = vector.broadcast %cst_32 : f32 to vector<64x1xf32>
    %81 = arith.addf %79, %80 : vector<64x1xf32>
    %82 = math.rsqrt %81 : vector<64x1xf32>
    %83 = vector.broadcast %82 : vector<64x1xf32> to vector<64x128xf32>
    %84 = arith.mulf %70, %83 : vector<64x128xf32>
    %85 = vector.broadcast %59 : vector<1x128xf32> to vector<64x128xf32>
    %86 = arith.mulf %84, %85 : vector<64x128xf32>
    %87 = vector.broadcast %60 : vector<1x128xf32> to vector<64x128xf32>
    %88 = arith.addf %86, %87 : vector<64x128xf32>
    %c0_33 = arith.constant 0 : index
    %c0_34 = arith.constant 0 : index
    %89 = vector.load %arg9[%c0_33, %c0_34] : memref<128x128xf32, #tpu.memory_space<vmem>>, vector<128x128xf32>
    %cst_35 = arith.constant dense<0.000000e+00> : vector<64x128xf32>
    %90 = tpu.matmul %88, %89, %cst_35 {dimension_numbers = #tpu.dot_dimension_numbers<[1], [0], [0], [1], [0, 0, 1, 1], [], []>} : vector<64x128xf32>, vector<128x128xf32>, vector<64x128xf32> -> vector<64x128xf32>
    %c0_36 = arith.constant 0 : index
    %c0_37 = arith.constant 0 : index
    %91 = vector.load %arg10[%c0_36, %c0_37] : memref<1x128xf32, #tpu.memory_space<vmem>>, vector<1x128xf32>
    %92 = vector.broadcast %91 : vector<1x128xf32> to vector<64x128xf32>
    %93 = arith.addf %90, %92 : vector<64x128xf32>
    %cst_38 = arith.constant 5.000000e-01 : f32
    %94 = vector.broadcast %cst_38 : f32 to vector<64x128xf32>
    %95 = arith.mulf %94, %93 : vector<64x128xf32>
    %cst_39 = arith.constant 0.707106769 : f32
    %96 = vector.broadcast %cst_39 : f32 to vector<64x128xf32>
    %97 = arith.mulf %93, %96 : vector<64x128xf32>
    %98 = math.absf %97 : vector<64x128xf32>
    %cst_40 = arith.constant 0.327591091 : f32
    %99 = vector.broadcast %cst_40 : f32 to vector<64x128xf32>
    %100 = arith.mulf %99, %98 : vector<64x128xf32>
    %cst_41 = arith.constant 1.000000e+00 : f32
    %101 = vector.broadcast %cst_41 : f32 to vector<64x128xf32>
    %102 = arith.addf %101, %100 : vector<64x128xf32>
    %cst_42 = arith.constant 1.000000e+00 : f32
    %103 = vector.broadcast %cst_42 : f32 to vector<64x128xf32>
    %104 = arith.divf %103, %102 : vector<64x128xf32>
    %cst_43 = arith.constant 1.06140542 : f32
    %105 = vector.broadcast %cst_43 : f32 to vector<64x128xf32>
    %106 = arith.mulf %104, %105 : vector<64x128xf32>
    %cst_44 = arith.constant -1.45315206 : f32
    %107 = vector.broadcast %cst_44 : f32 to vector<64x128xf32>
    %108 = arith.addf %107, %106 : vector<64x128xf32>
    %109 = arith.mulf %104, %108 : vector<64x128xf32>
    %cst_45 = arith.constant 1.42141378 : f32
    %110 = vector.broadcast %cst_45 : f32 to vector<64x128xf32>
    %111 = arith.addf %110, %109 : vector<64x128xf32>
    %112 = arith.mulf %104, %111 : vector<64x128xf32>
    %cst_46 = arith.constant -0.284496725 : f32
    %113 = vector.broadcast %cst_46 : f32 to vector<64x128xf32>
    %114 = arith.addf %113, %112 : vector<64x128xf32>
    %115 = arith.mulf %104, %114 : vector<64x128xf32>
    %cst_47 = arith.constant 0.254829586 : f32
    %116 = vector.broadcast %cst_47 : f32 to vector<64x128xf32>
    %117 = arith.addf %116, %115 : vector<64x128xf32>
    %118 = arith.mulf %104, %117 : vector<64x128xf32>
    %cst_48 = arith.constant 0.000000e+00 : f32
    %119 = vector.broadcast %cst_48 : f32 to vector<64x128xf32>
    %120 = arith.subf %119, %98 : vector<64x128xf32>
    %121 = arith.mulf %120, %98 : vector<64x128xf32>
    %122 = math.exp %121 : vector<64x128xf32>
    %123 = arith.mulf %118, %122 : vector<64x128xf32>
    %cst_49 = arith.constant 1.000000e+00 : f32
    %124 = vector.broadcast %cst_49 : f32 to vector<64x128xf32>
    %125 = arith.subf %124, %123 : vector<64x128xf32>
    %cst_50 = arith.constant 0.000000e+00 : f32
    %126 = vector.broadcast %cst_50 : f32 to vector<64x128xf32>
    %127 = arith.cmpf olt, %97, %126 : vector<64x128xf32>
    %cst_51 = arith.constant 0.000000e+00 : f32
    %128 = vector.broadcast %cst_51 : f32 to vector<64x128xf32>
    %129 = arith.subf %128, %125 : vector<64x128xf32>
    %130 = arith.select %127, %129, %125 : vector<64x128xi1>, vector<64x128xf32>
    %cst_52 = arith.constant 1.000000e+00 : f32
    %131 = vector.broadcast %cst_52 : f32 to vector<64x128xf32>
    %132 = arith.addf %131, %130 : vector<64x128xf32>
    %133 = arith.mulf %95, %132 : vector<64x128xf32>
    %c0_53 = arith.constant 0 : index
    %c0_54 = arith.constant 0 : index
    %134 = vector.load %arg11[%c0_53, %c0_54] : memref<128x128xf32, #tpu.memory_space<vmem>>, vector<128x128xf32>
    %cst_55 = arith.constant dense<0.000000e+00> : vector<64x128xf32>
    %135 = tpu.matmul %133, %134, %cst_55 {dimension_numbers = #tpu.dot_dimension_numbers<[1], [0], [0], [1], [0, 0, 1, 1], [], []>} : vector<64x128xf32>, vector<128x128xf32>, vector<64x128xf32> -> vector<64x128xf32>
    %c0_56 = arith.constant 0 : index
    %c0_57 = arith.constant 0 : index
    %136 = vector.load %arg12[%c0_56, %c0_57] : memref<1x128xf32, #tpu.memory_space<vmem>>, vector<1x128xf32>
    %137 = vector.broadcast %136 : vector<1x128xf32> to vector<64x128xf32>
    %138 = arith.addf %135, %137 : vector<64x128xf32>
    %139 = vector.shape_cast %4 : vector<1x64x128xf32> to vector<64x128xf32>
    %140 = arith.addf %139, %138 : vector<64x128xf32>
    %141 = vector.shape_cast %140 : vector<64x128xf32> to vector<1x64x128xf32>
    %c0_58 = arith.constant 0 : index
    %c0_59 = arith.constant 0 : index
    %c0_60 = arith.constant 0 : index
    %142 = vector.load %arg13[%c0_58, %c0_59, %c0_60] : memref<1x64x128xf32, #tpu.memory_space<vmem>>, vector<1x64x128xf32>
    tpu.vector_store %arg13[%c0_58, %c0_59, %c0_60], %141 {strides = array<i32>} : memref<1x64x128xf32, #tpu.memory_space<vmem>>, vector<1x64x128xf32>,
    return
  }
  func.func @transform_0(%arg0: i32) -> (i32, i32, i32) {
    %c0_i32 = arith.constant 0 : i32
    %c0_i32_0 = arith.constant 0 : i32
    %c0_i32_1 = arith.constant 0 : i32
    return %arg0, %c0_i32, %c0_i32_0 : i32, i32, i32
  }
  func.func @transform_1(%arg0: i32) -> (i32, i32) {
    %c0_i32 = arith.constant 0 : i32
    %c0_i32_0 = arith.constant 0 : i32
    %c0_i32_1 = arith.constant 0 : i32
    return %c0_i32, %c0_i32_0 : i32, i32
  }
  func.func @transform_2(%arg0: i32) -> (i32, i32) {
    %c0_i32 = arith.constant 0 : i32
    %c0_i32_0 = arith.constant 0 : i32
    %c0_i32_1 = arith.constant 0 : i32
    return %c0_i32, %c0_i32_0 : i32, i32
  }
  func.func @transform_3(%arg0: i32) -> (i32, i32) {
    %c0_i32 = arith.constant 0 : i32
    %c0_i32_0 = arith.constant 0 : i32
    %c0_i32_1 = arith.constant 0 : i32
    return %c0_i32, %c0_i32_0 : i32, i32
  }
  func.func @transform_4(%arg0: i32) -> (i32, i32) {
    %c0_i32 = arith.constant 0 : i32
    %c0_i32_0 = arith.constant 0 : i32
    %c0_i32_1 = arith.constant 0 : i32
    return %c0_i32, %c0_i32_0 : i32, i32
  }
  func.func @transform_5(%arg0: i32) -> (i32, i32) {
    %c0_i32 = arith.constant 0 : i32
    %c0_i32_0 = arith.constant 0 : i32
    %c0_i32_1 = arith.constant 0 : i32
    return %c0_i32, %c0_i32_0 : i32, i32
  }
  func.func @transform_6(%arg0: i32) -> (i32, i32) {
    %c0_i32 = arith.constant 0 : i32
    %c0_i32_0 = arith.constant 0 : i32
    %c0_i32_1 = arith.constant 0 : i32
    return %c0_i32, %c0_i32_0 : i32, i32
  }
  func.func @transform_7(%arg0: i32) -> (i32, i32) {
    %c0_i32 = arith.constant 0 : i32
    %c0_i32_0 = arith.constant 0 : i32
    %c0_i32_1 = arith.constant 0 : i32
    return %c0_i32, %c0_i32_0 : i32, i32
  }
  func.func @transform_8(%arg0: i32) -> (i32, i32) {
    %c0_i32 = arith.constant 0 : i32
    %c0_i32_0 = arith.constant 0 : i32
    %c0_i32_1 = arith.constant 0 : i32
    return %c0_i32, %c0_i32_0 : i32, i32
  }
  func.func @transform_9(%arg0: i32) -> (i32, i32) {
    %c0_i32 = arith.constant 0 : i32
    %c0_i32_0 = arith.constant 0 : i32
    %c0_i32_1 = arith.constant 0 : i32
    return %c0_i32, %c0_i32_0 : i32, i32
  }
  func.func @transform_10(%arg0: i32) -> (i32, i32) {
    %c0_i32 = arith.constant 0 : i32
    %c0_i32_0 = arith.constant 0 : i32
    %c0_i32_1 = arith.constant 0 : i32
    return %c0_i32, %c0_i32_0 : i32, i32
  }
  func.func @transform_11(%arg0: i32) -> (i32, i32) {
    %c0_i32 = arith.constant 0 : i32
    %c0_i32_0 = arith.constant 0 : i32
    %c0_i32_1 = arith.constant 0 : i32
    return %c0_i32, %c0_i32_0 : i32, i32
  }
  func.func @transform_12(%arg0: i32) -> (i32, i32, i32) {
    %c0_i32 = arith.constant 0 : i32
    %c0_i32_0 = arith.constant 0 : i32
    %c0_i32_1 = arith.constant 0 : i32
    return %arg0, %c0_i32, %c0_i32_0 : i32, i32, i32
  }
}

</mosaic_0001>

<llo_original>
// kernel: tpu_custom_call.1
$region0: #{tpu_custom_call.1}
  #allocation0 [shape = 'u32[]', space=smem, size = 0x4, offset = 0x4, fixed_abs, tag = 'smem constant byte address 0x4 - core index']
  #allocation1 [shape = 'u32[144,128]{1,0:T(1,128)}', space=vmem, size = 0x12000, scoped, tag = 'internal scratch']
  %s0 = inlined_call_operand.hbm [shape: f32[2,64,128], index: 0, kind: input, shape index: {}, may-alias: {0,12}]
  %s1 = inlined_call_operand.vmem [shape: f32[1,128], index: 1, kind: input, shape index: {}]
  %s2 = inlined_call_operand.vmem [shape: f32[1,128], index: 2, kind: input, shape index: {}]
  %s3 = inlined_call_operand.vmem [shape: f32[64,128], index: 3, kind: input, shape index: {}]
  %s4 = inlined_call_operand.vmem [shape: f32[64,1], index: 4, kind: input, shape index: {}]
  %s5 = inlined_call_operand.vmem [shape: f32[64,1], index: 5, kind: input, shape index: {}]
  %s6 = inlined_call_operand.vmem [shape: f32[1,128], index: 6, kind: input, shape index: {}]
  %s7 = inlined_call_operand.vmem [shape: f32[1,128], index: 7, kind: input, shape index: {}]
  %s8 = inlined_call_operand.vmem [shape: f32[128,128], index: 8, kind: input, shape index: {}]
  %s9 = inlined_call_operand.vmem [shape: f32[1,128], index: 9, kind: input, shape index: {}]
  %s10 = inlined_call_operand.vmem [shape: f32[128,128], index: 10, kind: input, shape index: {}]
  %s11 = inlined_call_operand.vmem [shape: f32[1,128], index: 11, kind: input, shape index: {}]
  %s12 = inlined_call_operand.hbm [shape: f32[2,64,128], index: 12, kind: output, shape index: {}, may-alias: {0,12}]
  %s13 = sld [smem:[#allocation0]]
  $region85: #{tpu_custom_call.1} parent=0
    _
  %s15 = ssub.s32 1, %s13
  %s16 = scalar_select 0, %s15, %s13
  $region1: #{tpu_custom_call.1} parent=0
    #allocation2 [shape = 'u8[65536]{0}', space=vmem, size = 0x10000, scoped, tag = 'input window, operand 0']
    #allocation3 [shape = 's32[2]{0}', space=sflag, size = 0x8, scoped, tag = 'scoped memory for tpu_custom_call.1']
    #allocation4 [shape = 's32[2]{0}', space=sflag, size = 0x8, scoped, tag = 'scoped memory for tpu_custom_call.1']
    #allocation5 [shape = 'u8[65536]{0}', space=vmem, size = 0x10000, scoped, tag = 'output window, operand 0']
    %17 = vsyncpa [#allocation3], 0
    %s18 = scalar_lea.sflag [#allocation3], 1
    %19 = vsyncpa %s18, 0
    %20 = vsyncpa [#allocation4], 0
    %s21 = scalar_lea.sflag [#allocation4], 1
    %22 = vsyncpa %s21, 0
    loop: start=0, step=1, limit=4
    $region2: #{tpu_custom_call.1} parent=1 // loop_pre_header
      _
    $region3: #{tpu_custom_call.1} parent=1 // loop_header
      %s24 = sphi 0, %s28
      %p25 = scmp.ge.s32.totalorder %s24, 4
      %s34 = sphi 0, %s36
      %s37 = sphi 0, %s34
      %s38 = sphi 0, %s37
      %s54 = sphi 0, %s38
      %s58 = sphi 0, %s58
      %s60 = sphi 0, %s58
      %s61 = sphi 0, %s60
      %s75 = sphi 0, %s61
      %s79 = sphi 0, %s79
      %s81 = sphi 0, %s79
      %s82 = sphi 0, %s81
      %s96 = sphi 0, %s82
      %s100 = sphi 0, %s100
      %s102 = sphi 0, %s100
      %s103 = sphi 0, %s102
      %s117 = sphi 0, %s103
      %s121 = sphi 0, %s121
      %s123 = sphi 0, %s121
      %s124 = sphi 0, %s123
      %s138 = sphi 0, %s124
      %s142 = sphi 0, %s142
      %s144 = sphi 0, %s142
      %s145 = sphi 0, %s144
      %s159 = sphi 0, %s145
      %s163 = sphi 0, %s163
      %s165 = sphi 0, %s163
      %s166 = sphi 0, %s165
      %s180 = sphi 0, %s166
      %s184 = sphi 0, %s184
      %s186 = sphi 0, %s184
      %s187 = sphi 0, %s186
      %s201 = sphi 0, %s187
      %s205 = sphi 0, %s205
      %s207 = sphi 0, %s205
      %s208 = sphi 0, %s207
      %s222 = sphi 0, %s208
      %s226 = sphi 0, %s226
      %s228 = sphi 0, %s226
      %s229 = sphi 0, %s228
      %s243 = sphi 0, %s229
      %s247 = sphi 0, %s247
      %s249 = sphi 0, %s247
      %s250 = sphi 0, %s249
      %s264 = sphi 0, %s250
      %s268 = sphi 0, %s268
      %s270 = sphi 0, %s268
      %s271 = sphi 0, %s270
      %s285 = sphi 0, %s271
      %s291 = sphi 0, %s293
      %s294 = sphi 0, %s291
      %s295 = sphi 0, %s294
      %s311 = sphi 0, %s295
    $region4: #{tpu_custom_call.1} parent=1 // loop_header_branch
      %27 = sbr.rel (%p25) target = $region8
    $region5: #{tpu_custom_call.1} parent=1 // loop_body
      %s29 = ssub.s32 %s24, 1
      %s30 = ssub.s32 %s24, 2
      %s31 = sadd.s32 %s24, 1
      %s32 = ssub.s32 %s24, %s31
      %p33 = scmp.eq.s32.totalorder %s32, 0
      %s35 = sadd.s32 %s34, 1
      %s36 = scalar_select %p33, %s34, %s35
      %p39 = pneg %p33
      %p40 = scmp.eq.s32.totalorder %s24, 1
      %p41 = por %p39, %p40
      %p42 = scmp.ne.s32.totalorder %s34, %s37
      %p43 = scmp.eq.s32.totalorder %s24, 0
      %p44 = por %p42, %p43
      %p45 = scmp.ne.s32.totalorder %s34, %s37
      %p46 = scmp.eq.s32.totalorder %s29, 1
      %p47 = por %p45, %p46
      %p48 = scmp.ne.s32.totalorder %s37, %s38
      %p49 = scmp.eq.s32.totalorder %s29, 0
      %p50 = por %p48, %p49
      %p51 = scmp.ne.s32.totalorder %s37, %s38
      %p52 = scmp.eq.s32.totalorder %s30, 1
      %p53 = por %p51, %p52
      %p55 = scmp.ne.s32.totalorder %s38, %s54
      %p56 = scmp.eq.s32.totalorder %s30, 0
      %p57 = por %p55, %p56
      %s59 = sadd.s32 %s58, 1
      %p62 = scmp.eq.s32.totalorder %s24, 1
      %p63 = scmp.ne.s32.totalorder %s58, %s60
      %p64 = scmp.eq.s32.totalorder %s24, 0
      %p65 = por %p63, %p64
      %p66 = scmp.ne.s32.totalorder %s58, %s60
      %p67 = scmp.eq.s32.totalorder %s29, 1
      %p68 = por %p66, %p67
      %p69 = scmp.ne.s32.totalorder %s60, %s61
      %p70 = scmp.eq.s32.totalorder %s29, 0
      %p71 = por %p69, %p70
      %p72 = scmp.ne.s32.totalorder %s60, %s61
      %p73 = scmp.eq.s32.totalorder %s30, 1
      %p74 = por %p72, %p73
      %p76 = scmp.ne.s32.totalorder %s61, %s75
      %p77 = scmp.eq.s32.totalorder %s30, 0
      %p78 = por %p76, %p77
      %s80 = sadd.s32 %s79, 1
      %p83 = scmp.eq.s32.totalorder %s24, 1
      %p84 = scmp.ne.s32.totalorder %s79, %s81
      %p85 = scmp.eq.s32.totalorder %s24, 0
      %p86 = por %p84, %p85
      %p87 = scmp.ne.s32.totalorder %s79, %s81
      %p88 = scmp.eq.s32.totalorder %s29, 1
      %p89 = por %p87, %p88
      %p90 = scmp.ne.s32.totalorder %s81, %s82
      %p91 = scmp.eq.s32.totalorder %s29, 0
      %p92 = por %p90, %p91
      %p93 = scmp.ne.s32.totalorder %s81, %s82
      %p94 = scmp.eq.s32.totalorder %s30, 1
      %p95 = por %p93, %p94
      %p97 = scmp.ne.s32.totalorder %s82, %s96
      %p98 = scmp.eq.s32.totalorder %s30, 0
      %p99 = por %p97, %p98
      %s101 = sadd.s32 %s100, 1
      %p104 = scmp.eq.s32.totalorder %s24, 1
      %p105 = scmp.ne.s32.totalorder %s100, %s102
      %p106 = scmp.eq.s32.totalorder %s24, 0
      %p107 = por %p105, %p106
      %p108 = scmp.ne.s32.totalorder %s100, %s102
      %p109 = scmp.eq.s32.totalorder %s29, 1
      %p110 = por %p108, %p109
      %p111 = scmp.ne.s32.totalorder %s102, %s103
      %p112 = scmp.eq.s32.totalorder %s29, 0
      %p113 = por %p111, %p112
      %p114 = scmp.ne.s32.totalorder %s102, %s103
      %p115 = scmp.eq.s32.totalorder %s30, 1
      %p116 = por %p114, %p115
      %p118 = scmp.ne.s32.totalorder %s103, %s117
      %p119 = scmp.eq.s32.totalorder %s30, 0
      %p120 = por %p118, %p119
      %s122 = sadd.s32 %s121, 1
      %p125 = scmp.eq.s32.totalorder %s24, 1
      %p126 = scmp.ne.s32.totalorder %s121, %s123
      %p127 = scmp.eq.s32.totalorder %s24, 0
      %p128 = por %p126, %p127
      %p129 = scmp.ne.s32.totalorder %s121, %s123
      %p130 = scmp.eq.s32.totalorder %s29, 1
      %p131 = por %p129, %p130
      %p132 = scmp.ne.s32.totalorder %s123, %s124
      %p133 = scmp.eq.s32.totalorder %s29, 0
      %p134 = por %p132, %p133
      %p135 = scmp.ne.s32.totalorder %s123, %s124
      %p136 = scmp.eq.s32.totalorder %s30, 1
      %p137 = por %p135, %p136
      %p139 = scmp.ne.s32.totalorder %s124, %s138
      %p140 = scmp.eq.s32.totalorder %s30, 0
      %p141 = por %p139, %p140
      %s143 = sadd.s32 %s142, 1
      %p146 = scmp.eq.s32.totalorder %s24, 1
      %p147 = scmp.ne.s32.totalorder %s142, %s144
      %p148 = scmp.eq.s32.totalorder %s24, 0
      %p149 = por %p147, %p148
      %p150 = scmp.ne.s32.totalorder %s142, %s144
      %p151 = scmp.eq.s32.totalorder %s29, 1
      %p152 = por %p150, %p151
      %p153 = scmp.ne.s32.totalorder %s144, %s145
      %p154 = scmp.eq.s32.totalorder %s29, 0
      %p155 = por %p153, %p154
      %p156 = scmp.ne.s32.totalorder %s144, %s145
      %p157 = scmp.eq.s32.totalorder %s30, 1
      %p158 = por %p156, %p157
      %p160 = scmp.ne.s32.totalorder %s145, %s159
      %p161 = scmp.eq.s32.totalorder %s30, 0
      %p162 = por %p160, %p161
      %s164 = sadd.s32 %s163, 1
      %p167 = scmp.eq.s32.totalorder %s24, 1
      %p168 = scmp.ne.s32.totalorder %s163, %s165
      %p169 = scmp.eq.s32.totalorder %s24, 0
      %p170 = por %p168, %p169
      %p171 = scmp.ne.s32.totalorder %s163, %s165
      %p172 = scmp.eq.s32.totalorder %s29, 1
      %p173 = por %p171, %p172
      %p174 = scmp.ne.s32.totalorder %s165, %s166
      %p175 = scmp.eq.s32.totalorder %s29, 0
      %p176 = por %p174, %p175
      %p177 = scmp.ne.s32.totalorder %s165, %s166
      %p178 = scmp.eq.s32.totalorder %s30, 1
      %p179 = por %p177, %p178
      %p181 = scmp.ne.s32.totalorder %s166, %s180
      %p182 = scmp.eq.s32.totalorder %s30, 0
      %p183 = por %p181, %p182
      %s185 = sadd.s32 %s184, 1
      %p188 = scmp.eq.s32.totalorder %s24, 1
      %p189 = scmp.ne.s32.totalorder %s184, %s186
      %p190 = scmp.eq.s32.totalorder %s24, 0
      %p191 = por %p189, %p190
      %p192 = scmp.ne.s32.totalorder %s184, %s186
      %p193 = scmp.eq.s32.totalorder %s29, 1
      %p194 = por %p192, %p193
      %p195 = scmp.ne.s32.totalorder %s186, %s187
      %p196 = scmp.eq.s32.totalorder %s29, 0
      %p197 = por %p195, %p196
      %p198 = scmp.ne.s32.totalorder %s186, %s187
      %p199 = scmp.eq.s32.totalorder %s30, 1
      %p200 = por %p198, %p199
      %p202 = scmp.ne.s32.totalorder %s187, %s201
      %p203 = scmp.eq.s32.totalorder %s30, 0
      %p204 = por %p202, %p203
      %s206 = sadd.s32 %s205, 1
      %p209 = scmp.eq.s32.totalorder %s24, 1
      %p210 = scmp.ne.s32.totalorder %s205, %s207
      %p211 = scmp.eq.s32.totalorder %s24, 0
      %p212 = por %p210, %p211
      %p213 = scmp.ne.s32.totalorder %s205, %s207
      %p214 = scmp.eq.s32.totalorder %s29, 1
      %p215 = por %p213, %p214
      %p216 = scmp.ne.s32.totalorder %s207, %s208
      %p217 = scmp.eq.s32.totalorder %s29, 0
      %p218 = por %p216, %p217
      %p219 = scmp.ne.s32.totalorder %s207, %s208
      %p220 = scmp.eq.s32.totalorder %s30, 1
      %p221 = por %p219, %p220
      %p223 = scmp.ne.s32.totalorder %s208, %s222
      %p224 = scmp.eq.s32.totalorder %s30, 0
      %p225 = por %p223, %p224
      %s227 = sadd.s32 %s226, 1
      %p230 = scmp.eq.s32.totalorder %s24, 1
      %p231 = scmp.ne.s32.totalorder %s226, %s228
      %p232 = scmp.eq.s32.totalorder %s24, 0
      %p233 = por %p231, %p232
      %p234 = scmp.ne.s32.totalorder %s226, %s228
      %p235 = scmp.eq.s32.totalorder %s29, 1
      %p236 = por %p234, %p235
      %p237 = scmp.ne.s32.totalorder %s228, %s229
      %p238 = scmp.eq.s32.totalorder %s29, 0
      %p239 = por %p237, %p238
      %p240 = scmp.ne.s32.totalorder %s228, %s229
      %p241 = scmp.eq.s32.totalorder %s30, 1
      %p242 = por %p240, %p241
      %p244 = scmp.ne.s32.totalorder %s229, %s243
      %p245 = scmp.eq.s32.totalorder %s30, 0
      %p246 = por %p244, %p245
      %s248 = sadd.s32 %s247, 1
      %p251 = scmp.eq.s32.totalorder %s24, 1
      %p252 = scmp.ne.s32.totalorder %s247, %s249
      %p253 = scmp.eq.s32.totalorder %s24, 0
      %p254 = por %p252, %p253
      %p255 = scmp.ne.s32.totalorder %s247, %s249
      %p256 = scmp.eq.s32.totalorder %s29, 1
      %p257 = por %p255, %p256
      %p258 = scmp.ne.s32.totalorder %s249, %s250
      %p259 = scmp.eq.s32.totalorder %s29, 0
      %p260 = por %p258, %p259
      %p261 = scmp.ne.s32.totalorder %s249, %s250
      %p262 = scmp.eq.s32.totalorder %s30, 1
      %p263 = por %p261, %p262
      %p265 = scmp.ne.s32.totalorder %s250, %s264
      %p266 = scmp.eq.s32.totalorder %s30, 0
      %p267 = por %p265, %p266
      %s269 = sadd.s32 %s268, 1
      %p272 = scmp.eq.s32.totalorder %s24, 1
      %p273 = scmp.ne.s32.totalorder %s268, %s270
      %p274 = scmp.eq.s32.totalorder %s24, 0
      %p275 = por %p273, %p274
      %p276 = scmp.ne.s32.totalorder %s268, %s270
      %p277 = scmp.eq.s32.totalorder %s29, 1
      %p278 = por %p276, %p277
      %p279 = scmp.ne.s32.totalorder %s270, %s271
      %p280 = scmp.eq.s32.totalorder %s29, 0
      %p281 = por %p279, %p280
      %p282 = scmp.ne.s32.totalorder %s270, %s271
      %p283 = scmp.eq.s32.totalorder %s30, 1
      %p284 = por %p282, %p283
      %p286 = scmp.ne.s32.totalorder %s271, %s285
      %p287 = scmp.eq.s32.totalorder %s30, 0
      %p288 = por %p286, %p287
      %s289 = ssub.s32 %s24, %s31
      %p290 = scmp.eq.s32.totalorder %s289, 0
      %s292 = sadd.s32 %s291, 1
      %s293 = scalar_select %p290, %s291, %s292
      %p296 = pneg %p290
      %p297 = scmp.eq.s32.totalorder %s24, 1
      %p298 = por %p296, %p297
      %p299 = scmp.ne.s32.totalorder %s291, %s294
      %p300 = scmp.eq.s32.totalorder %s24, 0
      %p301 = por %p299, %p300
      %p302 = scmp.ne.s32.totalorder %s291, %s294
      %p303 = scmp.eq.s32.totalorder %s29, 1
      %p304 = por %p302, %p303
      %p305 = scmp.ne.s32.totalorder %s294, %s295
      %p306 = scmp.eq.s32.totalorder %s29, 0
      %p307 = por %p305, %p306
      %p308 = scmp.ne.s32.totalorder %s294, %s295
      %p309 = scmp.eq.s32.totalorder %s30, 1
      %p310 = por %p308, %p309
      %p312 = scmp.ne.s32.totalorder %s295, %s311
      %p313 = scmp.eq.s32.totalorder %s30, 0
      %p314 = por %p312, %p313
      %p315 = scmp.le.s32.totalorder 1, %s24
      %p316 = scmp.lt.s32.totalorder %s24, 3
      %p317 = pnand %p315, %p316
      %p318 = pneg %p317
      // Predicated region
      $region9: #{tpu_custom_call.1} parent=5 // pred_check
        _
      $region10: #{tpu_custom_call.1} parent=5 // pred_check_branch
        %320 = sbr.rel (%p317) target = $region12
      $region11: #{tpu_custom_call.1} parent=5 // pred_region
        %s321 = ssub.s32 %s24, 1
        // Predicated region
        $region13: #{tpu_custom_call.1} parent=11 // pred_check
          %p322 = pneg %p71
        $region14: #{tpu_custom_call.1} parent=11 // pred_check_branch
          %324 = sbr.rel (%p322) target = $region16
        $region15: #{tpu_custom_call.1} parent=11 // pred_region
          _
        $region16: #{tpu_custom_call.1} parent=11 // pred_fallthru
          _
        // Predicated region
        $region17: #{tpu_custom_call.1} parent=11 // pred_check
          %p325 = pneg %p92
        $region18: #{tpu_custom_call.1} parent=11 // pred_check_branch
          %327 = sbr.rel (%p325) target = $region20
        $region19: #{tpu_custom_call.1} parent=11 // pred_region
          _
        $region20: #{tpu_custom_call.1} parent=11 // pred_fallthru
          _
        // Predicated region
        $region21: #{tpu_custom_call.1} parent=11 // pred_check
          %p328 = pneg %p113
        $region22: #{tpu_custom_call.1} parent=11 // pred_check_branch
          %330 = sbr.rel (%p328) target = $region24
        $region23: #{tpu_custom_call.1} parent=11 // pred_region
          _
        $region24: #{tpu_custom_call.1} parent=11 // pred_fallthru
          _
        // Predicated region
        $region25: #{tpu_custom_call.1} parent=11 // pred_check
          %p331 = pneg %p134
        $region26: #{tpu_custom_call.1} parent=11 // pred_check_branch
          %333 = sbr.rel (%p331) target = $region28
        $region27: #{tpu_custom_call.1} parent=11 // pred_region
          _
        $region28: #{tpu_custom_call.1} parent=11 // pred_fallthru
          _
        // Predicated region
        $region29: #{tpu_custom_call.1} parent=11 // pred_check
          %p334 = pneg %p155
        $region30: #{tpu_custom_call.1} parent=11 // pred_check_branch
          %336 = sbr.rel (%p334) target = $region32
        $region31: #{tpu_custom_call.1} parent=11 // pred_region
          _
        $region32: #{tpu_custom_call.1} parent=11 // pred_fallthru
          _
        // Predicated region
        $region33: #{tpu_custom_call.1} parent=11 // pred_check
          %p337 = pneg %p176
        $region34: #{tpu_custom_call.1} parent=11 // pred_check_branch
          %339 = sbr.rel (%p337) target = $region36
        $region35: #{tpu_custom_call.1} parent=11 // pred_region
          _
        $region36: #{tpu_custom_call.1} parent=11 // pred_fallthru
          _
        // Predicated region
        $region37: #{tpu_custom_call.1} parent=11 // pred_check
          %p340 = pneg %p197
        $region38: #{tpu_custom_call.1} parent=11 // pred_check_branch
          %342 = sbr.rel (%p340) target = $region40
        $region39: #{tpu_custom_call.1} parent=11 // pred_region
          _
        $region40: #{tpu_custom_call.1} parent=11 // pred_fallthru
          _
        // Predicated region
        $region41: #{tpu_custom_call.1} parent=11 // pred_check
          %p343 = pneg %p218
        $region42: #{tpu_custom_call.1} parent=11 // pred_check_branch
          %345 = sbr.rel (%p343) target = $region44
        $region43: #{tpu_custom_call.1} parent=11 // pred_region
          _
        $region44: #{tpu_custom_call.1} parent=11 // pred_fallthru
          _
        // Predicated region
        $region45: #{tpu_custom_call.1} parent=11 // pred_check
          %p346 = pneg %p239
        $region46: #{tpu_custom_call.1} parent=11 // pred_check_branch
          %348 = sbr.rel (%p346) target = $region48
        $region47: #{tpu_custom_call.1} parent=11 // pred_region
          _
        $region48: #{tpu_custom_call.1} parent=11 // pred_fallthru
          _
        // Predicated region
        $region49: #{tpu_custom_call.1} parent=11 // pred_check
          %p349 = pneg %p260
        $region50: #{tpu_custom_call.1} parent=11 // pred_check_branch
          %351 = sbr.rel (%p349) target = $region52
        $region51: #{tpu_custom_call.1} parent=11 // pred_region
          _
        $region52: #{tpu_custom_call.1} parent=11 // pred_fallthru
          _
        // Predicated region
        $region53: #{tpu_custom_call.1} parent=11 // pred_check
          %p352 = pneg %p281
        $region54: #{tpu_custom_call.1} parent=11 // pred_check_branch
          %354 = sbr.rel (%p352) target = $region56
        $region55: #{tpu_custom_call.1} parent=11 // pred_region
          _
        $region56: #{tpu_custom_call.1} parent=11 // pred_fallthru
          _
      $region12: #{tpu_custom_call.1} parent=5 // pred_fallthru
        _
      %p355 = scmp.lt.s32.totalorder %s24, 2
      // Predicated region
      $region57: #{tpu_custom_call.1} parent=5 // pred_check
        %p356 = pneg %p355
      $region58: #{tpu_custom_call.1} parent=5 // pred_check_branch
        %358 = sbr.rel (%p356) target = $region60
      $region59: #{tpu_custom_call.1} parent=5 // pred_region
        // Predicated region
        $region61: #{tpu_custom_call.1} parent=59 // pred_check
          %p359 = pneg %p44
        $region62: #{tpu_custom_call.1} parent=59 // pred_check_branch
          %361 = sbr.rel (%p359) target = $region64
        $region63: #{tpu_custom_call.1} parent=59 // pred_region
          %s362 = sand.u32 %s34, 1
          %s363 = scalar_lea.sflag [#allocation3], %s362
          %s364 = sand.u32 %s34, 1
          %s365 = smul.addr %s364, 64
          %s366 = scalar_lea.vmem [#allocation2], %s365
          %s368 = ssub.s32 1024, 1024
          %369 = vsyncadd %s363, %s368
          %s370 = smul.addr %s24, 8
          %s371 = smul.addr %s370, 128
          %s372 = scalar_lea.hbm %s0, %s371
          %s373 = sshll.u32 %s366, 4
          %s374 = int_to_ptr.vmem [resolvable:$true] %s373
          %379 = dma.hbm_to_vmem [thread:$0]  %s372, 1024, %s374, %s363, 128, 128, 8
        $region64: #{tpu_custom_call.1} parent=59 // pred_fallthru
          _
      $region60: #{tpu_custom_call.1} parent=5 // pred_fallthru
        _
      %p380 = scmp.le.s32.totalorder 1, %s24
      %p381 = scmp.lt.s32.totalorder %s24, 3
      %p382 = pnand %p380, %p381
      %p383 = pneg %p382
      // Predicated region
      $region65: #{tpu_custom_call.1} parent=5 // pred_check
        _
      $region66: #{tpu_custom_call.1} parent=5 // pred_check_branch
        %385 = sbr.rel (%p382) target = $region68
      $region67: #{tpu_custom_call.1} parent=5 // pred_region
        %s386 = ssub.s32 %s24, 1
        %s387 = sand.u32 %s37, 1
        %s388 = scalar_lea.sflag [#allocation3], %s387
        %s389 = sand.u32 %s37, 1
        %s390 = smul.addr %s389, 64
        %s391 = scalar_lea.vmem [#allocation2], %s390
        // Predicated region
        $region69: #{tpu_custom_call.1} parent=67 // pred_check
          %p392 = pneg %p50
        $region70: #{tpu_custom_call.1} parent=67 // pred_check_branch
          %394 = sbr.rel (%p392) target = $region72
        $region71: #{tpu_custom_call.1} parent=67 // pred_region
          %395 = dma.done %s388, 1024
        $region72: #{tpu_custom_call.1} parent=67 // pred_fallthru
          _
        %s396 = sand.u32 %s37, 1
        %s397 = scalar_lea.sflag [#allocation3], %s396
        %s398 = sand.u32 %s37, 1
        %s399 = smul.addr %s398, 64
        %s400 = scalar_lea.vmem [#allocation2], %s399
        %p401 = pneg %p50
        %p402 = pneg %p47
        %p403 = pneg %p71
        %p404 = pneg %p68
        %p405 = pneg %p92
        %p406 = pneg %p89
        %p407 = pneg %p113
        %p408 = pneg %p110
        %p409 = pneg %p134
        %p410 = pneg %p131
        %p411 = pneg %p155
        %p412 = pneg %p152
        %p413 = pneg %p176
        %p414 = pneg %p173
        %p415 = pneg %p197
        %p416 = pneg %p194
        %p417 = pneg %p218
        %p418 = pneg %p215
        %p419 = pneg %p239
        %p420 = pneg %p236
        %p421 = pneg %p260
        %p422 = pneg %p257
        %p423 = pneg %p281
        %p424 = pneg %p278
        %p425 = pneg %p307
        %p426 = pneg %p304
        %s427 = sand.u32 %s294, 1
        %s428 = scalar_lea.sflag [#allocation4], %s427
        %s429 = sand.u32 %s294, 1
        %s430 = smul.addr %s429, 64
        %s431 = scalar_lea.vmem [#allocation5], %s430
        %v432 = vlaneseq
        %v433 = vand.u32 %v432, 127
        %vm434 = vcmp.lt.s32.totalorder %v433, 32
        %v435 = vld [vmem:[%s391] sm:$0xff]
        %v436 = vld [vmem:[%s391 + $0x8] sm:$0xff]
        %v437 = vld [vmem:[%s391 + $0x10] sm:$0xff]
        %v438 = vld [vmem:[%s391 + $0x18] sm:$0xff]
        %v439 = vld [vmem:[%s391 + $0x20] sm:$0xff]
        %v440 = vld [vmem:[%s391 + $0x28] sm:$0xff]
        %v441 = vld [vmem:[%s391 + $0x30] sm:$0xff]
        %v442 = vld [vmem:[%s391 + $0x38] sm:$0xff]
        %v443 = vld [vmem:[%s1] sm:$0x1]
        %v444 = vld [vmem:[%s2] sm:$0x1]
        %v445 = vsel %vm434, 1, 0
        %vm446 = vcmp.eq.s32.totalorder %v445, 1
        %v447 = vsel %vm446, %v435, 0.0
        %v448 = vsel %vm446, %v436, 0.0
        %v449 = vsel %vm446, %v437, 0.0
        %v450 = vsel %vm446, %v438, 0.0
        %v451 = vsel %vm446, %v439, 0.0
        %v452 = vsel %vm446, %v440, 0.0
        %v453 = vsel %vm446, %v441, 0.0
        %v454 = vsel %vm446, %v442, 0.0
        %455 = vadd.xlane.f32.xlu0 %v447
        %v456 = vpop.xlane.xlu0 %455
        %457 = vadd.xlane.f32.xlu0 %v448
        %v458 = vpop.xlane.xlu0 %457
        %459 = vadd.xlane.f32.xlu0 %v449
        %v460 = vpop.xlane.xlu0 %459
        %461 = vadd.xlane.f32.xlu0 %v450
        %v462 = vpop.xlane.xlu0 %461
        %463 = vadd.xlane.f32.xlu0 %v451
        %v464 = vpop.xlane.xlu0 %463
        %465 = vadd.xlane.f32.xlu0 %v452
        %v466 = vpop.xlane.xlu0 %465
        %467 = vadd.xlane.f32.xlu0 %v453
        %v468 = vpop.xlane.xlu0 %467
        %469 = vadd.xlane.f32.xlu0 %v454
        %v470 = vpop.xlane.xlu0 %469
        %v471 = vmul.f32 %v456, 0.03125
        %v472 = vmul.f32 %v458, 0.03125
        %v473 = vmul.f32 %v460, 0.03125
        %v474 = vmul.f32 %v462, 0.03125
        %v475 = vmul.f32 %v464, 0.03125
        %v476 = vmul.f32 %v466, 0.03125
        %v477 = vmul.f32 %v468, 0.03125
        %v478 = vmul.f32 %v470, 0.03125
        %v479 = vsub.f32 %v435, %v471
        %v480 = vsub.f32 %v436, %v472
        %v481 = vsub.f32 %v437, %v473
        %v482 = vsub.f32 %v438, %v474
        %v483 = vsub.f32 %v439, %v475
        %v484 = vsub.f32 %v440, %v476
        %v485 = vsub.f32 %v441, %v477
        %v486 = vsub.f32 %v442, %v478
        %v487 = vsel %vm446, %v479, 0.0
        %v488 = vsel %vm446, %v480, 0.0
        %v489 = vsel %vm446, %v481, 0.0
        %v490 = vsel %vm446, %v482, 0.0
        %v491 = vsel %vm446, %v483, 0.0
        %v492 = vsel %vm446, %v484, 0.0
        %v493 = vsel %vm446, %v485, 0.0
        %v494 = vsel %vm446, %v486, 0.0
        %v495 = vmul.f32 %v487, %v487
        %v496 = vmul.f32 %v488, %v488
        %v497 = vmul.f32 %v489, %v489
        %v498 = vmul.f32 %v490, %v490
        %v499 = vmul.f32 %v491, %v491
        %v500 = vmul.f32 %v492, %v492
        %v501 = vmul.f32 %v493, %v493
        %v502 = vmul.f32 %v494, %v494
        %503 = vadd.xlane.f32.xlu0 %v495
        %v504 = vpop.xlane.xlu0 %503
        %505 = vadd.xlane.f32.xlu0 %v496
        %v506 = vpop.xlane.xlu0 %505
        %507 = vadd.xlane.f32.xlu0 %v497
        %v508 = vpop.xlane.xlu0 %507
        %509 = vadd.xlane.f32.xlu0 %v498
        %v510 = vpop.xlane.xlu0 %509
        %511 = vadd.xlane.f32.xlu0 %v499
        %v512 = vpop.xlane.xlu0 %511
        %513 = vadd.xlane.f32.xlu0 %v500
        %v514 = vpop.xlane.xlu0 %513
        %515 = vadd.xlane.f32.xlu0 %v501
        %v516 = vpop.xlane.xlu0 %515
        %517 = vadd.xlane.f32.xlu0 %v502
        %v518 = vpop.xlane.xlu0 %517
        %v519 = vmul.f32 %v504, 0.03125
        %v520 = vmul.f32 %v506, 0.03125
        %v521 = vmul.f32 %v508, 0.03125
        %v522 = vmul.f32 %v510, 0.03125
        %v523 = vmul.f32 %v512, 0.03125
        %v524 = vmul.f32 %v514, 0.03125
        %v525 = vmul.f32 %v516, 0.03125
        %v526 = vmul.f32 %v518, 0.03125
        %v527 = vadd.f32 %v519, 1e-05
        %v528 = vadd.f32 %v520, 1e-05
        %v529 = vadd.f32 %v521, 1e-05
        %v530 = vadd.f32 %v522, 1e-05
        %v531 = vadd.f32 %v523, 1e-05
        %v532 = vadd.f32 %v524, 1e-05
        %v533 = vadd.f32 %v525, 1e-05
        %v534 = vadd.f32 %v526, 1e-05
        %v535 = vrsqrt.pop %v527
        %v536 = vrsqrt.pop %v528
        %v537 = vrsqrt.pop %v529
        %v538 = vrsqrt.pop %v530
        %v539 = vrsqrt.pop %v531
        %v540 = vrsqrt.pop %v532
        %v541 = vrsqrt.pop %v533
        %v542 = vrsqrt.pop %v534
        %v543 = vmul.f32 %v479, %v535
        %v544 = vmul.f32 %v480, %v536
        %v545 = vmul.f32 %v481, %v537
        %v546 = vmul.f32 %v482, %v538
        %v547 = vmul.f32 %v483, %v539
        %v548 = vmul.f32 %v484, %v540
        %v549 = vmul.f32 %v485, %v541
        %v550 = vmul.f32 %v486, %v542
        %v552 = vlaneseq
        %v553 = vshrl.u32 %v552, 7
        %v554 = vsub.s32 0, %v553
        %v555 = vrot.slane %v443, %v554
        %v557 = vmul.f32 %v543, %v555
        %v558 = vmul.f32 %v544, %v555
        %v559 = vmul.f32 %v545, %v555
        %v560 = vmul.f32 %v546, %v555
        %v561 = vmul.f32 %v547, %v555
        %v562 = vmul.f32 %v548, %v555
        %v563 = vmul.f32 %v549, %v555
        %v564 = vmul.f32 %v550, %v555
        %v566 = vlaneseq
        %v567 = vshrl.u32 %v566, 7
        %v568 = vsub.s32 0, %v567
        %v569 = vrot.slane %v444, %v568
        %v571 = vadd.f32 %v557, %v569
        %v572 = vadd.f32 %v558, %v569
        %v573 = vadd.f32 %v559, %v569
        %v574 = vadd.f32 %v560, %v569
        %v575 = vadd.f32 %v561, %v569
        %v576 = vadd.f32 %v562, %v569
        %v577 = vadd.f32 %v563, %v569
        %v578 = vadd.f32 %v564, %v569
        %v579 = vmax.f32 %v571, 0.0
        %v580 = vmax.f32 %v572, 0.0
        %v581 = vmax.f32 %v573, 0.0
        %v582 = vmax.f32 %v574, 0.0
        %v583 = vmax.f32 %v575, 0.0
        %v584 = vmax.f32 %v576, 0.0
        %v585 = vmax.f32 %v577, 0.0
        %v586 = vmax.f32 %v578, 0.0
        %v587 = vadd.f32 %v579, 1e-06
        %v588 = vadd.f32 %v580, 1e-06
        %v589 = vadd.f32 %v581, 1e-06
        %v590 = vadd.f32 %v582, 1e-06
        %v591 = vadd.f32 %v583, 1e-06
        %v592 = vadd.f32 %v584, 1e-06
        %v593 = vadd.f32 %v585, 1e-06
        %v594 = vadd.f32 %v586, 1e-06
        %v595 = vmax.f32 %v587, %v591
        %v596 = vmax.f32 %v588, %v592
        %v597 = vmax.f32 %v589, %v593
        %v598 = vmax.f32 %v590, %v594
        %v599 = vmax.f32 %v595, %v596
        %v600 = vmax.f32 %v597, %v598
        %v601 = vmax.f32 %v599, %v600
        %v602 = vrot.slane %v601, 4
        %v603 = vmax.f32 %v601, %v602
        %v604 = vrot.slane %v603, 2
        %v605 = vmax.f32 %v603, %v604
        %v606 = vrot.slane %v605, 1
        %v607 = vmax.f32 %v605, %v606
        %v608 = vld [vmem:[%s3] sm:$0xff]
        %v609 = vld [vmem:[%s3 + $0x8] sm:$0xff]
        %v610 = vld [vmem:[%s3 + $0x10] sm:$0xff]
        %v611 = vld [vmem:[%s3 + $0x18] sm:$0xff]
        %v612 = vld [vmem:[%s3 + $0x20] sm:$0xff]
        %v613 = vld [vmem:[%s3 + $0x28] sm:$0xff]
        %v614 = vld [vmem:[%s3 + $0x30] sm:$0xff]
        %v615 = vld [vmem:[%s3 + $0x38] sm:$0xff]
        %v616 = vmul.f32 %v587, %v608
        %v617 = vmul.f32 %v588, %v609
        %v618 = vmul.f32 %v589, %v610
        %v619 = vmul.f32 %v590, %v611
        %v620 = vmul.f32 %v591, %v612
        %v621 = vmul.f32 %v592, %v613
        %v622 = vmul.f32 %v593, %v614
        %v623 = vmul.f32 %v594, %v615
        %v624 = vld [vmem:[%s4] sm:$0xff]
        %v625 = vld [vmem:[%s4 + $0x8] sm:$0xff]
        %v626 = vld [vmem:[%s4 + $0x10] sm:$0xff]
        %v627 = vld [vmem:[%s4 + $0x18] sm:$0xff]
        %v628 = vld [vmem:[%s4 + $0x20] sm:$0xff]
        %v629 = vld [vmem:[%s4 + $0x28] sm:$0xff]
        %v630 = vld [vmem:[%s4 + $0x30] sm:$0xff]
        %v631 = vld [vmem:[%s4 + $0x38] sm:$0xff]
        %633 = vset.pattern.permute.xlu0 0
        %634 = vperm.xlu0 %633, %v624
        %v635 = vpop.permute.xlu0 %634
        %638 = vset.pattern.permute.xlu0 0
        %639 = vperm.xlu0 %638, %v625
        %v640 = vpop.permute.xlu0 %639
        %643 = vset.pattern.permute.xlu0 0
        %644 = vperm.xlu0 %643, %v626
        %v645 = vpop.permute.xlu0 %644
        %648 = vset.pattern.permute.xlu0 0
        %649 = vperm.xlu0 %648, %v627
        %v650 = vpop.permute.xlu0 %649
        %653 = vset.pattern.permute.xlu0 0
        %654 = vperm.xlu0 %653, %v628
        %v655 = vpop.permute.xlu0 %654
        %658 = vset.pattern.permute.xlu0 0
        %659 = vperm.xlu0 %658, %v629
        %v660 = vpop.permute.xlu0 %659
        %663 = vset.pattern.permute.xlu0 0
        %664 = vperm.xlu0 %663, %v630
        %v665 = vpop.permute.xlu0 %664
        %668 = vset.pattern.permute.xlu0 0
        %669 = vperm.xlu0 %668, %v631
        %v670 = vpop.permute.xlu0 %669
        %v672 = vmul.f32 %v635, %v607
        %v673 = vmul.f32 %v640, %v607
        %v674 = vmul.f32 %v645, %v607
        %v675 = vmul.f32 %v650, %v607
        %v676 = vmul.f32 %v655, %v607
        %v677 = vmul.f32 %v660, %v607
        %v678 = vmul.f32 %v665, %v607
        %v679 = vmul.f32 %v670, %v607
        %v680 = vld [vmem:[%s5] sm:$0xff]
        %v681 = vld [vmem:[%s5 + $0x8] sm:$0xff]
        %v682 = vld [vmem:[%s5 + $0x10] sm:$0xff]
        %v683 = vld [vmem:[%s5 + $0x18] sm:$0xff]
        %v684 = vld [vmem:[%s5 + $0x20] sm:$0xff]
        %v685 = vld [vmem:[%s5 + $0x28] sm:$0xff]
        %v686 = vld [vmem:[%s5 + $0x30] sm:$0xff]
        %v687 = vld [vmem:[%s5 + $0x38] sm:$0xff]
        %689 = vset.pattern.permute.xlu0 0
        %690 = vperm.xlu0 %689, %v680
        %v691 = vpop.permute.xlu0 %690
        %694 = vset.pattern.permute.xlu0 0
        %695 = vperm.xlu0 %694, %v681
        %v696 = vpop.permute.xlu0 %695
        %699 = vset.pattern.permute.xlu0 0
        %700 = vperm.xlu0 %699, %v682
        %v701 = vpop.permute.xlu0 %700
        %704 = vset.pattern.permute.xlu0 0
        %705 = vperm.xlu0 %704, %v683
        %v706 = vpop.permute.xlu0 %705
        %709 = vset.pattern.permute.xlu0 0
        %710 = vperm.xlu0 %709, %v684
        %v711 = vpop.permute.xlu0 %710
        %714 = vset.pattern.permute.xlu0 0
        %715 = vperm.xlu0 %714, %v685
        %v716 = vpop.permute.xlu0 %715
        %719 = vset.pattern.permute.xlu0 0
        %720 = vperm.xlu0 %719, %v686
        %v721 = vpop.permute.xlu0 %720
        %724 = vset.pattern.permute.xlu0 0
        %725 = vperm.xlu0 %724, %v687
        %v726 = vpop.permute.xlu0 %725
        %v728 = vadd.f32 %v672, %v691
        %v729 = vadd.f32 %v673, %v696
        %v730 = vadd.f32 %v674, %v701
        %v731 = vadd.f32 %v675, %v706
        %v732 = vadd.f32 %v676, %v711
        %v733 = vadd.f32 %v677, %v716
        %v734 = vadd.f32 %v678, %v721
        %v735 = vadd.f32 %v679, %v726
        %v736 = vmax.f32 %v728, 0.0
        %v737 = vmax.f32 %v729, 0.0
        %v738 = vmax.f32 %v730, 0.0
        %v739 = vmax.f32 %v731, 0.0
        %v740 = vmax.f32 %v732, 0.0
        %v741 = vmax.f32 %v733, 0.0
        %v742 = vmax.f32 %v734, 0.0
        %v743 = vmax.f32 %v735, 0.0
        %v744 = vadd.f32 %v616, %v736
        %v745 = vadd.f32 %v617, %v737
        %v746 = vadd.f32 %v618, %v738
        %v747 = vadd.f32 %v619, %v739
        %v748 = vadd.f32 %v620, %v740
        %v749 = vadd.f32 %v621, %v741
        %v750 = vadd.f32 %v622, %v742
        %v751 = vadd.f32 %v623, %v743
        %v752 = vld [vmem:[%s6] sm:$0x1]
        %v753 = vld [vmem:[%s7] sm:$0x1]
        %v754 = vsel %vm446, %v744, 0.0
        %v755 = vsel %vm446, %v745, 0.0
        %v756 = vsel %vm446, %v746, 0.0
        %v757 = vsel %vm446, %v747, 0.0
        %v758 = vsel %vm446, %v748, 0.0
        %v759 = vsel %vm446, %v749, 0.0
        %v760 = vsel %vm446, %v750, 0.0
        %v761 = vsel %vm446, %v751, 0.0
        %762 = vadd.xlane.f32.xlu0 %v754
        %v763 = vpop.xlane.xlu0 %762
        %764 = vadd.xlane.f32.xlu0 %v755
        %v765 = vpop.xlane.xlu0 %764
        %766 = vadd.xlane.f32.xlu0 %v756
        %v767 = vpop.xlane.xlu0 %766
        %768 = vadd.xlane.f32.xlu0 %v757
        %v769 = vpop.xlane.xlu0 %768
        %770 = vadd.xlane.f32.xlu0 %v758
        %v771 = vpop.xlane.xlu0 %770
        %772 = vadd.xlane.f32.xlu0 %v759
        %v773 = vpop.xlane.xlu0 %772
        %774 = vadd.xlane.f32.xlu0 %v760
        %v775 = vpop.xlane.xlu0 %774
        %776 = vadd.xlane.f32.xlu0 %v761
        %v777 = vpop.xlane.xlu0 %776
        %v778 = vmul.f32 %v763, 0.03125
        %v779 = vmul.f32 %v765, 0.03125
        %v780 = vmul.f32 %v767, 0.03125
        %v781 = vmul.f32 %v769, 0.03125
        %v782 = vmul.f32 %v771, 0.03125
        %v783 = vmul.f32 %v773, 0.03125
        %v784 = vmul.f32 %v775, 0.03125
        %v785 = vmul.f32 %v777, 0.03125
        %v786 = vsub.f32 %v744, %v778
        %v787 = vsub.f32 %v745, %v779
        %v788 = vsub.f32 %v746, %v780
        %v789 = vsub.f32 %v747, %v781
        %v790 = vsub.f32 %v748, %v782
        %v791 = vsub.f32 %v749, %v783
        %v792 = vsub.f32 %v750, %v784
        %v793 = vsub.f32 %v751, %v785
        %v794 = vsel %vm446, %v786, 0.0
        %v795 = vsel %vm446, %v787, 0.0
        %v796 = vsel %vm446, %v788, 0.0
        %v797 = vsel %vm446, %v789, 0.0
        %v798 = vsel %vm446, %v790, 0.0
        %v799 = vsel %vm446, %v791, 0.0
        %v800 = vsel %vm446, %v792, 0.0
        %v801 = vsel %vm446, %v793, 0.0
        %v802 = vmul.f32 %v794, %v794
        %v803 = vmul.f32 %v795, %v795
        %v804 = vmul.f32 %v796, %v796
        %v805 = vmul.f32 %v797, %v797
        %v806 = vmul.f32 %v798, %v798
        %v807 = vmul.f32 %v799, %v799
        %v808 = vmul.f32 %v800, %v800
        %v809 = vmul.f32 %v801, %v801
        %810 = vadd.xlane.f32.xlu0 %v802
        %v811 = vpop.xlane.xlu0 %810
        %812 = vadd.xlane.f32.xlu0 %v803
        %v813 = vpop.xlane.xlu0 %812
        %814 = vadd.xlane.f32.xlu0 %v804
        %v815 = vpop.xlane.xlu0 %814
        %816 = vadd.xlane.f32.xlu0 %v805
        %v817 = vpop.xlane.xlu0 %816
        %818 = vadd.xlane.f32.xlu0 %v806
        %v819 = vpop.xlane.xlu0 %818
        %820 = vadd.xlane.f32.xlu0 %v807
        %v821 = vpop.xlane.xlu0 %820
        %822 = vadd.xlane.f32.xlu0 %v808
        %v823 = vpop.xlane.xlu0 %822
        %824 = vadd.xlane.f32.xlu0 %v809
        %v825 = vpop.xlane.xlu0 %824
        %v826 = vmul.f32 %v811, 0.03125
        %v827 = vmul.f32 %v813, 0.03125
        %v828 = vmul.f32 %v815, 0.03125
        %v829 = vmul.f32 %v817, 0.03125
        %v830 = vmul.f32 %v819, 0.03125
        %v831 = vmul.f32 %v821, 0.03125
        %v832 = vmul.f32 %v823, 0.03125
        %v833 = vmul.f32 %v825, 0.03125
        %v834 = vadd.f32 %v826, 1e-05
        %v835 = vadd.f32 %v827, 1e-05
        %v836 = vadd.f32 %v828, 1e-05
        %v837 = vadd.f32 %v829, 1e-05
        %v838 = vadd.f32 %v830, 1e-05
        %v839 = vadd.f32 %v831, 1e-05
        %v840 = vadd.f32 %v832, 1e-05
        %v841 = vadd.f32 %v833, 1e-05
        %v842 = vrsqrt.pop %v834
        %v843 = vrsqrt.pop %v835
        %v844 = vrsqrt.pop %v836
        %v845 = vrsqrt.pop %v837
        %v846 = vrsqrt.pop %v838
        %v847 = vrsqrt.pop %v839
        %v848 = vrsqrt.pop %v840
        %v849 = vrsqrt.pop %v841
        %v850 = vmul.f32 %v786, %v842
        %v851 = vmul.f32 %v787, %v843
        %v852 = vmul.f32 %v788, %v844
        %v853 = vmul.f32 %v789, %v845
        %v854 = vmul.f32 %v790, %v846
        %v855 = vmul.f32 %v791, %v847
        %v856 = vmul.f32 %v792, %v848
        %v857 = vmul.f32 %v793, %v849
        %v859 = vlaneseq
        %v860 = vshrl.u32 %v859, 7
        %v861 = vsub.s32 0, %v860
        %v862 = vrot.slane %v752, %v861
        %v864 = vmul.f32 %v850, %v862
        %v865 = vmul.f32 %v851, %v862
        %v866 = vmul.f32 %v852, %v862
        %v867 = vmul.f32 %v853, %v862
        %v868 = vmul.f32 %v854, %v862
        %v869 = vmul.f32 %v855, %v862
        %v870 = vmul.f32 %v856, %v862
        %v871 = vmul.f32 %v857, %v862
        %v873 = vlaneseq
        %v874 = vshrl.u32 %v873, 7
        %v875 = vsub.s32 0, %v874
        %v876 = vrot.slane %v753, %v875
        %v878 = vadd.f32 %v864, %v876
        %v879 = vadd.f32 %v865, %v876
        %v880 = vadd.f32 %v866, %v876
        %v881 = vadd.f32 %v867, %v876
        %v882 = vadd.f32 %v868, %v876
        %v883 = vadd.f32 %v869, %v876
        %v884 = vadd.f32 %v870, %v876
        %v885 = vadd.f32 %v871, %v876
        %v886 = vld [vmem:[%s8] sm:$0xff]
        %v887 = vld [vmem:[%s8 + $0x8] sm:$0xff]
        %v888 = vld [vmem:[%s8 + $0x10] sm:$0xff]
        %v889 = vld [vmem:[%s8 + $0x18] sm:$0xff]
        %v890 = vld [vmem:[%s8 + $0x20] sm:$0xff]
        %v891 = vld [vmem:[%s8 + $0x28] sm:$0xff]
        %v892 = vld [vmem:[%s8 + $0x30] sm:$0xff]
        %v893 = vld [vmem:[%s8 + $0x38] sm:$0xff]
        %v894 = vld [vmem:[%s8 + $0x40] sm:$0xff]
        %v895 = vld [vmem:[%s8 + $0x48] sm:$0xff]
        %v896 = vld [vmem:[%s8 + $0x50] sm:$0xff]
        %v897 = vld [vmem:[%s8 + $0x58] sm:$0xff]
        %v898 = vld [vmem:[%s8 + $0x60] sm:$0xff]
        %v899 = vld [vmem:[%s8 + $0x68] sm:$0xff]
        %v900 = vld [vmem:[%s8 + $0x70] sm:$0xff]
        %v901 = vld [vmem:[%s8 + $0x78] sm:$0xff]
        %v902 = vld [vmem:[%s9] sm:$0x1]
        %v904 = vlaneseq
        %v905 = vshrl.u32 %v904, 7
        %v906 = vsub.s32 0, %v905
        %v907 = vrot.slane %v902, %v906
        %909 = vmatprep.subr.mxu0 0.0
        %910 = vmatpush1.msra.mxu0 %v886
        %911 = vmatprep.subr.mxu0 0.0
        %912 = vmatpush1.msra.mxu0 %v887
        %913 = vmatprep.subr.mxu0 0.0
        %914 = vmatpush1.msra.mxu0 %v888
        %915 = vmatprep.subr.mxu0 0.0
        %916 = vmatpush1.msra.mxu0 %v889
        %917 = vmatprep.subr.mxu0 0.0
        %918 = vmatpush1.msra.mxu0 %v890
        %919 = vmatprep.subr.mxu0 0.0
        %920 = vmatpush1.msra.mxu0 %v891
        %921 = vmatprep.subr.mxu0 0.0
        %922 = vmatpush1.msra.mxu0 %v892
        %923 = vmatprep.subr.mxu0 0.0
        %924 = vmatpush1.msra.mxu0 %v893
        %925 = vmatprep.subr.mxu0 0.0
        %926 = vmatpush1.msra.mxu0 %v894
        %927 = vmatprep.subr.mxu0 0.0
        %928 = vmatpush1.msra.mxu0 %v895
        %929 = vmatprep.subr.mxu0 0.0
        %930 = vmatpush1.msra.mxu0 %v896
        %931 = vmatprep.subr.mxu0 0.0
        %932 = vmatpush1.msra.mxu0 %v897
        %933 = vmatprep.subr.mxu0 0.0
        %934 = vmatpush1.msra.mxu0 %v898
        %935 = vmatprep.subr.mxu0 0.0
        %936 = vmatpush1.msra.mxu0 %v899
        %937 = vmatprep.subr.mxu0 0.0
        %938 = vmatpush1.msra.mxu0 %v900
        %939 = vmatprep.subr.mxu0 0.0
        %940 = vmatpush1.msra.mxu0 %v901
        %941 = vmatprep.subr.mxu0 0.0
        %942 = vmatpush1.msra.mxu0 0.0
        %943 = vmatprep.subr.mxu0 0.0
        %944 = vmatpush1.msra.mxu0 0.0
        %945 = vmatprep.subr.mxu0 0.0
        %946 = vmatpush1.msra.mxu0 0.0
        %947 = vmatprep.subr.mxu0 0.0
        %948 = vmatpush1.msra.mxu0 0.0
        %949 = vmatprep.subr.mxu0 0.0
        %950 = vmatpush1.msra.mxu0 0.0
        %951 = vmatprep.subr.mxu0 0.0
        %952 = vmatpush1.msra.mxu0 0.0
        %953 = vmatprep.subr.mxu0 0.0
        %954 = vmatpush1.msra.mxu0 0.0
        %955 = vmatprep.subr.mxu0 0.0
        %956 = vmatpush1.msra.mxu0 0.0
        %957 = vmatprep.subr.mxu0 0.0
        %958 = vmatpush1.msra.mxu0 0.0
        %959 = vmatprep.subr.mxu0 0.0
        %960 = vmatpush1.msra.mxu0 0.0
        %961 = vmatprep.subr.mxu0 0.0
        %962 = vmatpush1.msra.mxu0 0.0
        %963 = vmatprep.subr.mxu0 0.0
        %964 = vmatpush1.msra.mxu0 0.0
        %965 = vmatprep.subr.mxu0 0.0
        %966 = vmatpush1.msra.mxu0 0.0
        %967 = vmatprep.subr.mxu0 0.0
        %968 = vmatpush1.msra.mxu0 0.0
        %969 = vmatprep.subr.mxu0 0.0
        %970 = vmatpush1.msra.mxu0 0.0
        %971 = vmatprep.subr.mxu0 0.0
        %972 = vmatpush1.msra.mxu0 0.0
        %973 = vmatprep.mubr.f32.mxu0 0.0
        %974 = vmatmul.mubr.f32.gmra.mrb[0].mxu0 %v878
        %v975 = vpop.f32.mrb[0].mxu0
        %v976 = vadd.f32 %v907, %v975
        %v977 = vpop.f32.mrb[0].mxu0
        %978 = vmatprep.mubr.f32.mxu0 0.0
        %979 = vmatmul.mubr.f32.gmra.mrb[0].mxu0 %v879
        %v980 = vpop.f32.mrb[0].mxu0
        %v981 = vadd.f32 %v907, %v980
        %v982 = vpop.f32.mrb[0].mxu0
        %983 = vmatprep.mubr.f32.mxu0 0.0
        %984 = vmatmul.mubr.f32.gmra.mrb[0].mxu0 %v880
        %v985 = vpop.f32.mrb[0].mxu0
        %v986 = vadd.f32 %v907, %v985
        %v987 = vpop.f32.mrb[0].mxu0
        %988 = vmatprep.mubr.f32.mxu0 0.0
        %989 = vmatmul.mubr.f32.gmra.mrb[0].mxu0 %v881
        %v990 = vpop.f32.mrb[0].mxu0
        %v991 = vadd.f32 %v907, %v990
        %v992 = vpop.f32.mrb[0].mxu0
        %993 = vmatprep.mubr.f32.mxu0 0.0
        %994 = vmatmul.mubr.f32.gmra.mrb[0].mxu0 %v882
        %v995 = vpop.f32.mrb[0].mxu0
        %v996 = vadd.f32 %v907, %v995
        %v997 = vpop.f32.mrb[0].mxu0
        %998 = vmatprep.mubr.f32.mxu0 0.0
        %999 = vmatmul.mubr.f32.gmra.mrb[0].mxu0 %v883
        %v1000 = vpop.f32.mrb[0].mxu0
        %v1001 = vadd.f32 %v907, %v1000
        %v1002 = vpop.f32.mrb[0].mxu0
        %1003 = vmatprep.mubr.f32.mxu0 0.0
        %1004 = vmatmul.mubr.f32.gmra.mrb[0].mxu0 %v884
        %v1005 = vpop.f32.mrb[0].mxu0
        %v1006 = vadd.f32 %v907, %v1005
        %v1007 = vpop.f32.mrb[0].mxu0
        %1008 = vmatprep.mubr.f32.mxu0 0.0
        %1009 = vmatmul.mubr.f32.gmra.mrb[0].mxu0 %v885
        %v1010 = vpop.f32.mrb[0].mxu0
        %v1011 = vadd.f32 %v907, %v1010
        %v1012 = vpop.f32.mrb[0].mxu0
        %1013 = vdwg.mxu0
        %v1014 = vmul.f32 %v976, 0.5
        %v1015 = vmul.f32 %v981, 0.5
        %v1016 = vmul.f32 %v986, 0.5
        %v1017 = vmul.f32 %v991, 0.5
        %v1018 = vmul.f32 %v996, 0.5
        %v1019 = vmul.f32 %v1001, 0.5
        %v1020 = vmul.f32 %v1006, 0.5
        %v1021 = vmul.f32 %v1011, 0.5
        %v1022 = vmul.f32 %v976, 0.70710677
        %v1023 = vmul.f32 %v981, 0.70710677
        %v1024 = vmul.f32 %v986, 0.70710677
        %v1025 = vmul.f32 %v991, 0.70710677
        %v1026 = vmul.f32 %v996, 0.70710677
        %v1027 = vmul.f32 %v1001, 0.70710677
        %v1028 = vmul.f32 %v1006, 0.70710677
        %v1029 = vmul.f32 %v1011, 0.70710677
        %v1030 = vand.u32 2147483647, %v1022
        %v1031 = vand.u32 2147483647, %v1023
        %v1032 = vand.u32 2147483647, %v1024
        %v1033 = vand.u32 2147483647, %v1025
        %v1034 = vand.u32 2147483647, %v1026
        %v1035 = vand.u32 2147483647, %v1027
        %v1036 = vand.u32 2147483647, %v1028
        %v1037 = vand.u32 2147483647, %v1029
        %v1038 = vmul.f32 %v1030, 0.3275911
        %v1039 = vmul.f32 %v1031, 0.3275911
        %v1040 = vmul.f32 %v1032, 0.3275911
        %v1041 = vmul.f32 %v1033, 0.3275911
        %v1042 = vmul.f32 %v1034, 0.3275911
        %v1043 = vmul.f32 %v1035, 0.3275911
        %v1044 = vmul.f32 %v1036, 0.3275911
        %v1045 = vmul.f32 %v1037, 0.3275911
        %v1046 = vadd.f32 %v1038, 1.0
        %v1047 = vadd.f32 %v1039, 1.0
        %v1048 = vadd.f32 %v1040, 1.0
        %v1049 = vadd.f32 %v1041, 1.0
        %v1050 = vadd.f32 %v1042, 1.0
        %v1051 = vadd.f32 %v1043, 1.0
        %v1052 = vadd.f32 %v1044, 1.0
        %v1053 = vadd.f32 %v1045, 1.0
        %v1054 = vrcp.pop %v1046
        %v1055 = vmul.f32 1.0, %v1054
        %v1056 = vrcp.pop %v1047
        %v1057 = vmul.f32 1.0, %v1056
        %v1058 = vrcp.pop %v1048
        %v1059 = vmul.f32 1.0, %v1058
        %v1060 = vrcp.pop %v1049
        %v1061 = vmul.f32 1.0, %v1060
        %v1062 = vrcp.pop %v1050
        %v1063 = vmul.f32 1.0, %v1062
        %v1064 = vrcp.pop %v1051
        %v1065 = vmul.f32 1.0, %v1064
        %v1066 = vrcp.pop %v1052
        %v1067 = vmul.f32 1.0, %v1066
        %v1068 = vrcp.pop %v1053
        %v1069 = vmul.f32 1.0, %v1068
        %v1070 = vmul.f32 %v1055, 1.0614054
        %v1071 = vmul.f32 %v1057, 1.0614054
        %v1072 = vmul.f32 %v1059, 1.0614054
        %v1073 = vmul.f32 %v1061, 1.0614054
        %v1074 = vmul.f32 %v1063, 1.0614054
        %v1075 = vmul.f32 %v1065, 1.0614054
        %v1076 = vmul.f32 %v1067, 1.0614054
        %v1077 = vmul.f32 %v1069, 1.0614054
        %v1078 = vadd.f32 %v1070, -1.4531521
        %v1079 = vadd.f32 %v1071, -1.4531521
        %v1080 = vadd.f32 %v1072, -1.4531521
        %v1081 = vadd.f32 %v1073, -1.4531521
        %v1082 = vadd.f32 %v1074, -1.4531521
        %v1083 = vadd.f32 %v1075, -1.4531521
        %v1084 = vadd.f32 %v1076, -1.4531521
        %v1085 = vadd.f32 %v1077, -1.4531521
        %v1086 = vmul.f32 %v1055, %v1078
        %v1087 = vmul.f32 %v1057, %v1079
        %v1088 = vmul.f32 %v1059, %v1080
        %v1089 = vmul.f32 %v1061, %v1081
        %v1090 = vmul.f32 %v1063, %v1082
        %v1091 = vmul.f32 %v1065, %v1083
        %v1092 = vmul.f32 %v1067, %v1084
        %v1093 = vmul.f32 %v1069, %v1085
        %v1094 = vadd.f32 %v1086, 1.4214138
        %v1095 = vadd.f32 %v1087, 1.4214138
        %v1096 = vadd.f32 %v1088, 1.4214138
        %v1097 = vadd.f32 %v1089, 1.4214138
        %v1098 = vadd.f32 %v1090, 1.4214138
        %v1099 = vadd.f32 %v1091, 1.4214138
        %v1100 = vadd.f32 %v1092, 1.4214138
        %v1101 = vadd.f32 %v1093, 1.4214138
        %v1102 = vmul.f32 %v1055, %v1094
        %v1103 = vmul.f32 %v1057, %v1095
        %v1104 = vmul.f32 %v1059, %v1096
        %v1105 = vmul.f32 %v1061, %v1097
        %v1106 = vmul.f32 %v1063, %v1098
        %v1107 = vmul.f32 %v1065, %v1099
        %v1108 = vmul.f32 %v1067, %v1100
        %v1109 = vmul.f32 %v1069, %v1101
        %v1110 = vadd.f32 %v1102, -0.28449672
        %v1111 = vadd.f32 %v1103, -0.28449672
        %v1112 = vadd.f32 %v1104, -0.28449672
        %v1113 = vadd.f32 %v1105, -0.28449672
        %v1114 = vadd.f32 %v1106, -0.28449672
        %v1115 = vadd.f32 %v1107, -0.28449672
        %v1116 = vadd.f32 %v1108, -0.28449672
        %v1117 = vadd.f32 %v1109, -0.28449672
        %v1118 = vmul.f32 %v1055, %v1110
        %v1119 = vmul.f32 %v1057, %v1111
        %v1120 = vmul.f32 %v1059, %v1112
        %v1121 = vmul.f32 %v1061, %v1113
        %v1122 = vmul.f32 %v1063, %v1114
        %v1123 = vmul.f32 %v1065, %v1115
        %v1124 = vmul.f32 %v1067, %v1116
        %v1125 = vmul.f32 %v1069, %v1117
        %v1126 = vadd.f32 %v1118, 0.2548296
        %v1127 = vadd.f32 %v1119, 0.2548296
        %v1128 = vadd.f32 %v1120, 0.2548296
        %v1129 = vadd.f32 %v1121, 0.2548296
        %v1130 = vadd.f32 %v1122, 0.2548296
        %v1131 = vadd.f32 %v1123, 0.2548296
        %v1132 = vadd.f32 %v1124, 0.2548296
        %v1133 = vadd.f32 %v1125, 0.2548296
        %v1134 = vmul.f32 %v1055, %v1126
        %v1135 = vmul.f32 %v1057, %v1127
        %v1136 = vmul.f32 %v1059, %v1128
        %v1137 = vmul.f32 %v1061, %v1129
        %v1138 = vmul.f32 %v1063, %v1130
        %v1139 = vmul.f32 %v1065, %v1131
        %v1140 = vmul.f32 %v1067, %v1132
        %v1141 = vmul.f32 %v1069, %v1133
        %v1142 = vsub.f32 0.0, %v1030
        %v1143 = vsub.f32 0.0, %v1031
        %v1144 = vsub.f32 0.0, %v1032
        %v1145 = vsub.f32 0.0, %v1033
        %v1146 = vsub.f32 0.0, %v1034
        %v1147 = vsub.f32 0.0, %v1035
        %v1148 = vsub.f32 0.0, %v1036
        %v1149 = vsub.f32 0.0, %v1037
        %v1150 = vmul.f32 %v1142, %v1030
        %v1151 = vmul.f32 %v1143, %v1031
        %v1152 = vmul.f32 %v1144, %v1032
        %v1153 = vmul.f32 %v1145, %v1033
        %v1154 = vmul.f32 %v1146, %v1034
        %v1155 = vmul.f32 %v1147, %v1035
        %v1156 = vmul.f32 %v1148, %v1036
        %v1157 = vmul.f32 %v1149, %v1037
        %v1158 = vmul.f32 %v1150, 1.442695
        %v1159 = vpow.pop %v1158
        %v1160 = vmul.f32 %v1151, 1.442695
        %v1161 = vpow.pop %v1160
        %v1162 = vmul.f32 %v1152, 1.442695
        %v1163 = vpow.pop %v1162
        %v1164 = vmul.f32 %v1153, 1.442695
        %v1165 = vpow.pop %v1164
        %v1166 = vmul.f32 %v1154, 1.442695
        %v1167 = vpow.pop %v1166
        %v1168 = vmul.f32 %v1155, 1.442695
        %v1169 = vpow.pop %v1168
        %v1170 = vmul.f32 %v1156, 1.442695
        %v1171 = vpow.pop %v1170
        %v1172 = vmul.f32 %v1157, 1.442695
        %v1173 = vpow.pop %v1172
        %v1174 = vmul.f32 %v1134, %v1159
        %v1175 = vmul.f32 %v1135, %v1161
        %v1176 = vmul.f32 %v1136, %v1163
        %v1177 = vmul.f32 %v1137, %v1165
        %v1178 = vmul.f32 %v1138, %v1167
        %v1179 = vmul.f32 %v1139, %v1169
        %v1180 = vmul.f32 %v1140, %v1171
        %v1181 = vmul.f32 %v1141, %v1173
        %v1182 = vsub.f32 1.0, %v1174
        %v1183 = vsub.f32 1.0, %v1175
        %v1184 = vsub.f32 1.0, %v1176
        %v1185 = vsub.f32 1.0, %v1177
        %v1186 = vsub.f32 1.0, %v1178
        %v1187 = vsub.f32 1.0, %v1179
        %v1188 = vsub.f32 1.0, %v1180
        %v1189 = vsub.f32 1.0, %v1181
        %vm1190 = vcmp.lt.f32.partialorder %v1022, 0.0
        %vm1191 = vcmp.lt.f32.partialorder %v1023, 0.0
        %vm1192 = vcmp.lt.f32.partialorder %v1024, 0.0
        %vm1193 = vcmp.lt.f32.partialorder %v1025, 0.0
        %vm1194 = vcmp.lt.f32.partialorder %v1026, 0.0
        %vm1195 = vcmp.lt.f32.partialorder %v1027, 0.0
        %vm1196 = vcmp.lt.f32.partialorder %v1028, 0.0
        %vm1197 = vcmp.lt.f32.partialorder %v1029, 0.0
        %v1198 = vsub.f32 0.0, %v1182
        %v1199 = vsub.f32 0.0, %v1183
        %v1200 = vsub.f32 0.0, %v1184
        %v1201 = vsub.f32 0.0, %v1185
        %v1202 = vsub.f32 0.0, %v1186
        %v1203 = vsub.f32 0.0, %v1187
        %v1204 = vsub.f32 0.0, %v1188
        %v1205 = vsub.f32 0.0, %v1189
        %v1206 = vsel %vm1190, %v1198, %v1182
        %v1207 = vsel %vm1191, %v1199, %v1183
        %v1208 = vsel %vm1192, %v1200, %v1184
        %v1209 = vsel %vm1193, %v1201, %v1185
        %v1210 = vsel %vm1194, %v1202, %v1186
        %v1211 = vsel %vm1195, %v1203, %v1187
        %v1212 = vsel %vm1196, %v1204, %v1188
        %v1213 = vsel %vm1197, %v1205, %v1189
        %v1214 = vadd.f32 %v1206, 1.0
        %v1215 = vadd.f32 %v1207, 1.0
        %v1216 = vadd.f32 %v1208, 1.0
        %v1217 = vadd.f32 %v1209, 1.0
        %v1218 = vadd.f32 %v1210, 1.0
        %v1219 = vadd.f32 %v1211, 1.0
        %v1220 = vadd.f32 %v1212, 1.0
        %v1221 = vadd.f32 %v1213, 1.0
        %v1222 = vmul.f32 %v1014, %v1214
        %v1223 = vmul.f32 %v1015, %v1215
        %v1224 = vmul.f32 %v1016, %v1216
        %v1225 = vmul.f32 %v1017, %v1217
        %v1226 = vmul.f32 %v1018, %v1218
        %v1227 = vmul.f32 %v1019, %v1219
        %v1228 = vmul.f32 %v1020, %v1220
        %v1229 = vmul.f32 %v1021, %v1221
        %v1230 = vld [vmem:[%s10] sm:$0xff]
        %v1231 = vld [vmem:[%s10 + $0x8] sm:$0xff]
        %v1232 = vld [vmem:[%s10 + $0x10] sm:$0xff]
        %v1233 = vld [vmem:[%s10 + $0x18] sm:$0xff]
        %v1234 = vld [vmem:[%s10 + $0x20] sm:$0xff]
        %v1235 = vld [vmem:[%s10 + $0x28] sm:$0xff]
        %v1236 = vld [vmem:[%s10 + $0x30] sm:$0xff]
        %v1237 = vld [vmem:[%s10 + $0x38] sm:$0xff]
        %v1238 = vld [vmem:[%s10 + $0x40] sm:$0xff]
        %v1239 = vld [vmem:[%s10 + $0x48] sm:$0xff]
        %v1240 = vld [vmem:[%s10 + $0x50] sm:$0xff]
        %v1241 = vld [vmem:[%s10 + $0x58] sm:$0xff]
        %v1242 = vld [vmem:[%s10 + $0x60] sm:$0xff]
        %v1243 = vld [vmem:[%s10 + $0x68] sm:$0xff]
        %v1244 = vld [vmem:[%s10 + $0x70] sm:$0xff]
        %v1245 = vld [vmem:[%s10 + $0x78] sm:$0xff]
        %v1246 = vld [vmem:[%s11] sm:$0x1]
        %v1248 = vlaneseq
        %v1249 = vshrl.u32 %v1248, 7
        %v1250 = vsub.s32 0, %v1249
        %v1251 = vrot.slane %v1246, %v1250
        %1253 = vmatprep.subr.mxu0 0.0
        %1254 = vmatpush1.msra.mxu0 %v1230
        %1255 = vmatprep.subr.mxu0 0.0
        %1256 = vmatpush1.msra.mxu0 %v1231
        %1257 = vmatprep.subr.mxu0 0.0
        %1258 = vmatpush1.msra.mxu0 %v1232
        %1259 = vmatprep.subr.mxu0 0.0
        %1260 = vmatpush1.msra.mxu0 %v1233
        %1261 = vmatprep.subr.mxu0 0.0
        %1262 = vmatpush1.msra.mxu0 %v1234
        %1263 = vmatprep.subr.mxu0 0.0
        %1264 = vmatpush1.msra.mxu0 %v1235
        %1265 = vmatprep.subr.mxu0 0.0
        %1266 = vmatpush1.msra.mxu0 %v1236
        %1267 = vmatprep.subr.mxu0 0.0
        %1268 = vmatpush1.msra.mxu0 %v1237
        %1269 = vmatprep.subr.mxu0 0.0
        %1270 = vmatpush1.msra.mxu0 %v1238
        %1271 = vmatprep.subr.mxu0 0.0
        %1272 = vmatpush1.msra.mxu0 %v1239
        %1273 = vmatprep.subr.mxu0 0.0
        %1274 = vmatpush1.msra.mxu0 %v1240
        %1275 = vmatprep.subr.mxu0 0.0
        %1276 = vmatpush1.msra.mxu0 %v1241
        %1277 = vmatprep.subr.mxu0 0.0
        %1278 = vmatpush1.msra.mxu0 %v1242
        %1279 = vmatprep.subr.mxu0 0.0
        %1280 = vmatpush1.msra.mxu0 %v1243
        %1281 = vmatprep.subr.mxu0 0.0
        %1282 = vmatpush1.msra.mxu0 %v1244
        %1283 = vmatprep.subr.mxu0 0.0
        %1284 = vmatpush1.msra.mxu0 %v1245
        %1285 = vmatprep.subr.mxu0 0.0
        %1286 = vmatpush1.msra.mxu0 0.0
        %1287 = vmatprep.subr.mxu0 0.0
        %1288 = vmatpush1.msra.mxu0 0.0
        %1289 = vmatprep.subr.mxu0 0.0
        %1290 = vmatpush1.msra.mxu0 0.0
        %1291 = vmatprep.subr.mxu0 0.0
        %1292 = vmatpush1.msra.mxu0 0.0
        %1293 = vmatprep.subr.mxu0 0.0
        %1294 = vmatpush1.msra.mxu0 0.0
        %1295 = vmatprep.subr.mxu0 0.0
        %1296 = vmatpush1.msra.mxu0 0.0
        %1297 = vmatprep.subr.mxu0 0.0
        %1298 = vmatpush1.msra.mxu0 0.0
        %1299 = vmatprep.subr.mxu0 0.0
        %1300 = vmatpush1.msra.mxu0 0.0
        %1301 = vmatprep.subr.mxu0 0.0
        %1302 = vmatpush1.msra.mxu0 0.0
        %1303 = vmatprep.subr.mxu0 0.0
        %1304 = vmatpush1.msra.mxu0 0.0
        %1305 = vmatprep.subr.mxu0 0.0
        %1306 = vmatpush1.msra.mxu0 0.0
        %1307 = vmatprep.subr.mxu0 0.0
        %1308 = vmatpush1.msra.mxu0 0.0
        %1309 = vmatprep.subr.mxu0 0.0
        %1310 = vmatpush1.msra.mxu0 0.0
        %1311 = vmatprep.subr.mxu0 0.0
        %1312 = vmatpush1.msra.mxu0 0.0
        %1313 = vmatprep.subr.mxu0 0.0
        %1314 = vmatpush1.msra.mxu0 0.0
        %1315 = vmatprep.subr.mxu0 0.0
        %1316 = vmatpush1.msra.mxu0 0.0
        %1317 = vmatprep.mubr.f32.mxu0 0.0
        %1318 = vmatmul.mubr.f32.gmra.mrb[0].mxu0 %v1222
        %v1319 = vpop.f32.mrb[0].mxu0
        %v1320 = vadd.f32 %v1251, %v1319
        %v1321 = vpop.f32.mrb[0].mxu0
        %1322 = vmatprep.mubr.f32.mxu0 0.0
        %1323 = vmatmul.mubr.f32.gmra.mrb[0].mxu0 %v1223
        %v1324 = vpop.f32.mrb[0].mxu0
        %v1325 = vadd.f32 %v1251, %v1324
        %v1326 = vpop.f32.mrb[0].mxu0
        %1327 = vmatprep.mubr.f32.mxu0 0.0
        %1328 = vmatmul.mubr.f32.gmra.mrb[0].mxu0 %v1224
        %v1329 = vpop.f32.mrb[0].mxu0
        %v1330 = vadd.f32 %v1251, %v1329
        %v1331 = vpop.f32.mrb[0].mxu0
        %1332 = vmatprep.mubr.f32.mxu0 0.0
        %1333 = vmatmul.mubr.f32.gmra.mrb[0].mxu0 %v1225
        %v1334 = vpop.f32.mrb[0].mxu0
        %v1335 = vadd.f32 %v1251, %v1334
        %v1336 = vpop.f32.mrb[0].mxu0
        %1337 = vmatprep.mubr.f32.mxu0 0.0
        %1338 = vmatmul.mubr.f32.gmra.mrb[0].mxu0 %v1226
        %v1339 = vpop.f32.mrb[0].mxu0
        %v1340 = vadd.f32 %v1251, %v1339
        %v1341 = vpop.f32.mrb[0].mxu0
        %1342 = vmatprep.mubr.f32.mxu0 0.0
        %1343 = vmatmul.mubr.f32.gmra.mrb[0].mxu0 %v1227
        %v1344 = vpop.f32.mrb[0].mxu0
        %v1345 = vadd.f32 %v1251, %v1344
        %v1346 = vpop.f32.mrb[0].mxu0
        %1347 = vmatprep.mubr.f32.mxu0 0.0
        %1348 = vmatmul.mubr.f32.gmra.mrb[0].mxu0 %v1228
        %v1349 = vpop.f32.mrb[0].mxu0
        %v1350 = vadd.f32 %v1251, %v1349
        %v1351 = vpop.f32.mrb[0].mxu0
        %1352 = vmatprep.mubr.f32.mxu0 0.0
        %1353 = vmatmul.mubr.f32.gmra.mrb[0].mxu0 %v1229
        %v1354 = vpop.f32.mrb[0].mxu0
        %v1355 = vadd.f32 %v1251, %v1354
        %v1356 = vpop.f32.mrb[0].mxu0
        %1357 = vdwg.mxu0
        %v1358 = vadd.f32 %v435, %v1320
        %v1359 = vadd.f32 %v436, %v1325
        %v1360 = vadd.f32 %v437, %v1330
        %v1361 = vadd.f32 %v438, %v1335
        %v1362 = vadd.f32 %v439, %v1340
        %v1363 = vadd.f32 %v440, %v1345
        %v1364 = vadd.f32 %v441, %v1350
        %v1365 = vadd.f32 %v442, %v1355
        %1366 = vst [vmem:[%s431] sm:$0xff] %v1358
        %1367 = vst [vmem:[%s431 + $0x8] sm:$0xff] %v1359
        %1368 = vst [vmem:[%s431 + $0x10] sm:$0xff] %v1360
        %1369 = vst [vmem:[%s431 + $0x18] sm:$0xff] %v1361
        %1370 = vst [vmem:[%s431 + $0x20] sm:$0xff] %v1362
        %1371 = vst [vmem:[%s431 + $0x28] sm:$0xff] %v1363
        %1372 = vst [vmem:[%s431 + $0x30] sm:$0xff] %v1364
        %1373 = vst [vmem:[%s431 + $0x38] sm:$0xff] %v1365
        %s1374 = sand.u32 %s294, 1
        %s1375 = scalar_lea.sflag [#allocation4], %s1374
        %s1376 = sand.u32 %s294, 1
        %s1377 = smul.addr %s1376, 64
        %s1378 = scalar_lea.vmem [#allocation5], %s1377
        // Predicated region
        $region73: #{tpu_custom_call.1} parent=67 // pred_check
          %p1379 = pneg %p304
        $region74: #{tpu_custom_call.1} parent=67 // pred_check_branch
          %1381 = sbr.rel (%p1379) target = $region76
        $region75: #{tpu_custom_call.1} parent=67 // pred_region
          %s1383 = ssub.s32 1024, 1024
          %1384 = vsyncadd %s1375, %s1383
          %s1385 = smul.addr %s29, 8
          %s1386 = smul.addr %s1385, 128
          %s1387 = scalar_lea.hbm %s12, %s1386
          %s1388 = sshll.u32 %s1378, 4
          %s1389 = int_to_ptr.vmem [resolvable:$true] %s1388
          %1394 = dma.vmem_to_hbm [thread:$0]  %s1389, 1024, %s1387, %s1375, 128, 128, 8
        $region76: #{tpu_custom_call.1} parent=67 // pred_fallthru
          _
      $region68: #{tpu_custom_call.1} parent=5 // pred_fallthru
        _
      %p1395 = scmp.le.s32.totalorder 2, %s24
      // Predicated region
      $region77: #{tpu_custom_call.1} parent=5 // pred_check
        %p1396 = pneg %p1395
      $region78: #{tpu_custom_call.1} parent=5 // pred_check_branch
        %1398 = sbr.rel (%p1396) target = $region80
      $region79: #{tpu_custom_call.1} parent=5 // pred_region
        %s1399 = ssub.s32 %s24, 2
        // Predicated region
        $region81: #{tpu_custom_call.1} parent=79 // pred_check
          %p1400 = pneg %p310
        $region82: #{tpu_custom_call.1} parent=79 // pred_check_branch
          %1402 = sbr.rel (%p1400) target = $region84
        $region83: #{tpu_custom_call.1} parent=79 // pred_region
          %s1403 = sand.u32 %s295, 1
          %s1404 = scalar_lea.sflag [#allocation4], %s1403
          %s1405 = sand.u32 %s295, 1
          %s1406 = smul.addr %s1405, 64
          %s1407 = scalar_lea.vmem [#allocation5], %s1406
          %1408 = dma.done %s1404, 1024
        $region84: #{tpu_custom_call.1} parent=79 // pred_fallthru
          _
      $region80: #{tpu_custom_call.1} parent=5 // pred_fallthru
        _
    $region6: #{tpu_custom_call.1} parent=1 // loop_footer
      %s28 = sadd.s32 1, %s24
    $region7: #{tpu_custom_call.1} parent=1 // loop_footer_branch
      %23 = sbr.rel target = $region3
    $region8: #{tpu_custom_call.1} parent=1 // loop_exit
      _
    %1409 = vsyncpa [#allocation3], 1
    %s1410 = scalar_lea.sflag [#allocation3], 1
    %1411 = vsyncpa %s1410, 1
    %1412 = vsyncpa [#allocation4], 1
    %s1413 = scalar_lea.sflag [#allocation4], 1
    %1414 = vsyncpa %s1413, 1

</llo_original>
